<compile_context>
chip_gen: v7x
topology: tpu7x:2x2x1
jax: 0.10.0
libtpu: 0.0.40
codegen_flags: <defaults>
</compile_context>

<pallas_src>
import functools

import jax
import jax.numpy as jnp
from jax import lax
from jax.experimental import pallas as pl
from jax.experimental.pallas import tpu as pltpu

_MIB = 1024 * 1024
_TINY_TABLE_ELEMS = 16 * 1024  # below this, plain jnp beats a pallas_call launch


@functools.lru_cache(maxsize=1)
def _chip_config():
    """Returns (tpu_generation, num_tensorcores, target f32-equivalent block bytes)."""
    gen = 0
    try:
        kind = jax.devices()[0].device_kind.lower()
        for g in (7, 6, 5, 4):
            if f"v{g}" in kind:
                gen = g
                break
    except Exception:
        pass
    if gen >= 7:
        # v7x: 2 TensorCores, ~3.2 TB/s HBM -> bigger blocks to amortize the
        # ~0.35 us per-grid-step cost; 64 MiB physical VMEM bounds the budget.
        return gen, 2, 8 * _MIB
    if gen == 5:
        # v5e: single TC, ~0.82 TB/s HBM already hides per-step overhead.
        return gen, 1, 2 * _MIB
    # v6e / unknown: single TC.
    return gen, 1, 4 * _MIB


def _make_margin_kernel(n_rows, tile_rows, power, n_blocks, tiles_per_core, core_split):
    """sum_rows(max(sum_j x**power - 1, 0)) accumulated into a per-core block."""

    def kernel(x_ref, o_ref):
        if core_split:
            c = pl.program_id(0)              # core split (parallel)
            j = pl.program_id(1)              # row-tile index within the core (arbitrary)
            logical_block = c * tiles_per_core + j
        else:
            j = pl.program_id(0)              # flat 1-D grid on single-TC parts
            logical_block = j

        @pl.when(j == 0)
        def _():
            o_ref[...] = jnp.zeros_like(o_ref)

        def compute():
            x = x_ref[...].astype(jnp.float32)
            x_p = x * x if power == 2 else x ** power
            row_p = jnp.sum(x_p, axis=1, keepdims=True)        # (tile_rows, 1)
            margin = jnp.maximum(row_p - 1.0, 0.0)             # (tile_rows, 1)

            row0 = logical_block * tile_rows
            is_tail = row0 + tile_rows > n_rows

            @pl.when(jnp.logical_not(is_tail))
            def _():
                # Interior tiles: unmasked fast path (no iota / compare / select).
                # Broadcast-add of the scalar into the whole (1,8,128) block;
                # every element of the block carries the same running sum.
                o_ref[...] += jnp.sum(margin)

            @pl.when(is_tail)
            def _():
                # Tail tile only: mask rows past n_rows.  The where is the final
                # select so OOB-read garbage (NaN/Inf) can never reach the sum.
                row_ids = row0 + lax.broadcasted_iota(jnp.int32, (tile_rows, 1), 0)
                o_ref[...] += jnp.sum(jnp.where(row_ids < n_rows, margin, 0.0))

        if core_split:
            # Odd n_blocks under the 2-way core split re-reads one clamped
            # duplicate block; the DMA is unavoidable under auto-pipelining but
            # the compute is skipped entirely.
            pl.when(logical_block < n_blocks)(compute)
        else:
            compute()

    return kernel


def _jnp_margin_loss(x, power):
    row_p = jnp.sum(x.astype(jnp.float32) ** power, axis=1, keepdims=True)
    return jnp.sum(jnp.maximum(row_p - 1.0, 0.0))


def _table_margin_loss(x, power):
    """Margin-loss contribution of one 2-D embedding table."""
    n, d = x.shape
    if n * d <= _TINY_TABLE_ELEMS:
        # Launch + per-grid-step + output round-trip dwarf the math; let XLA fuse.
        return _jnp_margin_loss(x, power)

    _, num_cores, target_f32_bytes = _chip_config()
    itemsize = jnp.dtype(x.dtype).itemsize
    # Minimum sublane multiple per dtype: f32 -> 8, bf16 -> 16, int8/fp8 -> 32.
    mult = max(8, 32 // itemsize)
    # Size tiles from the lane-padded VMEM footprint (d < 128 pads to 128 lanes),
    # in f32-equivalent bytes since the kernel upcasts before squaring.
    d_padded = ((d + 127) // 128) * 128

    if n <= mult:
        tile_rows = n  # single full-extent block (block dim == array dim is legal)
    else:
        target_rows = max(mult, (target_f32_bytes // (d_padded * 4)) // mult * mult)
        tile_rows = min(target_rows, (n // mult) * mult)

    n_blocks = pl.cdiv(n, tile_rows)
    core_split = (num_cores >= 2) and (n_blocks > 1)

    # VMEM budget: double-buffered input block + allowance for the in-kernel f32
    # upcast / squared temporaries + headroom.  Capped below v7x's 64 MiB.
    storage_block = tile_rows * d_padded * itemsize
    f32_block = tile_rows * d_padded * 4
    vmem_limit = min(56 * _MIB, max(16 * _MIB, 2 * storage_block + 3 * f32_block + 8 * _MIB))

    cost = pl.CostEstimate(
        flops=2 * n * d,
        transcendentals=0,
        bytes_accessed=n * d * itemsize,
    )

    if core_split:
        tiles_per_core = pl.cdiv(n_blocks, 2)
        kernel = _make_margin_kernel(n, tile_rows, power, n_blocks, tiles_per_core, True)
        out = pl.pallas_call(
            kernel,
            out_shape=jax.ShapeDtypeStruct((2, 8, 128), jnp.float32),
            grid_spec=pltpu.PrefetchScalarGridSpec(
                num_scalar_prefetch=0,
                grid=(2, tiles_per_core),
                in_specs=[
                    pl.BlockSpec(
                        (tile_rows, d),
                        # Clamp so the block index never exceeds the real range; the
                        # duplicated (clamped) block's compute is skipped in-kernel.
                        lambda c, j: (jnp.minimum(c * tiles_per_core + j, n_blocks - 1), 0),
                    )
                ],
                out_specs=pl.BlockSpec((1, 8, 128), lambda c, j: (c, 0, 0)),
            ),
            compiler_params=pltpu.CompilerParams(
                dimension_semantics=("parallel", "arbitrary"),
                vmem_limit_bytes=vmem_limit,
            ),
            cost_estimate=cost,
        )(x)
    else:
        kernel = _make_margin_kernel(n, tile_rows, power, n_blocks, n_blocks, False)
        out = pl.pallas_call(
            kernel,
            out_shape=jax.ShapeDtypeStruct((1, 8, 128), jnp.float32),
            grid_spec=pltpu.PrefetchScalarGridSpec(
                num_scalar_prefetch=0,
                grid=(n_blocks,),
                in_specs=[pl.BlockSpec((tile_rows, d), lambda j: (j, 0))],
                out_specs=pl.BlockSpec((1, 8, 128), lambda j: (0, 0, 0)),
            ),
            compiler_params=pltpu.CompilerParams(
                dimension_semantics=("arbitrary",),
                vmem_limit_bytes=vmem_limit,
            ),
            cost_estimate=cost,
        )(x)

    # Every element of a core's (8,128) block holds that core's total; read one
    # element per core and sum the per-core partials.
    return jnp.sum(out[:, 0, 0])


def emb_margin_loss(*embeddings, power=2):
    """JAX/Pallas equivalent of EmbMarginLoss.forward (0-d f32 scalar)."""
    total = jnp.float32(0.0)
    for e in embeddings:
        assert e.ndim >= 2, "EmbMarginLoss reduces over dim=1; need rank >= 2"
        if e.ndim == 2:
            total = total + _table_margin_loss(e, power)
        else:
            # TODO(synk): dedicated >2-D Pallas path (3-D BlockSpec reducing over dim 1
            # in-kernel).  The fused XLA expression below avoids the extra full HBM
            # read+write a wrapper-side transpose+reshape would cost.
            row_p = jnp.sum(e.astype(jnp.float32) ** power, axis=1, keepdims=True)
            total = total + jnp.sum(jnp.maximum(row_p - 1.0, 0.0))
    return total  # 0-d scalar, matching torch.tensor(0.0) accumulation


if __name__ == "__main__":
    key = jax.random.PRNGKey(0)
    k1, k2, k3, k4 = jax.random.split(key, 4)

    # user: f32 table, 2 grid steps with a masked partial tail tile (1000 -> 992 + 8).
    user_emb = jax.random.normal(k1, (1000, 64), dtype=jnp.float32)
    # item: f32 table with d=96 (exercises lane-padded d<128 tile sizing) + 1-row tail.
    item_emb = jax.random.normal(k2, (513, 96), dtype=jnp.float32)
    # rel: bf16 storage (16-row sublane multiple) with a masked partial tail tile.
    rel_emb = jax.random.normal(k3, (300, 64), dtype=jnp.float32).astype(jnp.bfloat16)
    # ent: tiny table with tiny norms -> plain-jnp fast path + exercises the max(.,0) clamp.
    ent_emb = 0.05 * jax.random.normal(k4, (20, 32), dtype=jnp.float32)

    loss = emb_margin_loss(user_emb, item_emb, rel_emb, ent_emb, power=2)
    jax.block_until_ready(loss)

    # Pure-JAX reference (same math as the PyTorch module, f32 accumulation).
    def ref_one(e):
        norm_e = jnp.sum(e.astype(jnp.float32) ** 2, axis=1, keepdims=True)
        return jnp.sum(jnp.maximum(norm_e - 1.0, 0.0))

    ref = ref_one(user_emb) + ref_one(item_emb) + ref_one(rel_emb) + ref_one(ent_emb)

    assert loss.shape == (), loss.shape
    assert jnp.allclose(loss, ref, rtol=1e-5, atol=1e-3), (loss, ref)

    print("KERNEL_OK")
</pallas_src>

<mosaic_0001>
module attributes {stable_mosaic.version = 11 : i64} {
  func.func @kernel(%arg0: i32, %arg1: memref<1000x64xf32, #tpu.memory_space<vmem>>, %arg2: memref<1x8x128xf32, #tpu.memory_space<vmem>>) attributes {dimension_semantics = [#tpu.dimension_semantics<arbitrary>], iteration_bounds = array<i64: 1>, scalar_prefetch = 0 : i64, scratch_operands = 0 : i64, tpu.core_type = #tpu.core_type<tc>, window_params = [{transform_indices = @transform_0, window_bounds = array<i64: 1000, 64>}, {pipeline_mode = #tpu.pipeline_mode<synchronous>, transform_indices = @transform_1, window_bounds = array<i64: 1, 8, 128>}]} {
    %c0_i32 = arith.constant 0 : i32
    %0 = arith.cmpi eq, %arg0, %c0_i32 : i32
    %1 = arith.extui %0 : i1 to i32
    %c0_i32_0 = arith.constant 0 : i32
    %2 = arith.cmpi ne, %1, %c0_i32_0 : i32
    scf.if %2 {
      %cst_8 = arith.constant 0.000000e+00 : f32
      %19 = vector.broadcast %cst_8 : f32 to vector<1x8x128xf32>
      %c0_9 = arith.constant 0 : index
      %c0_10 = arith.constant 0 : index
      %c0_11 = arith.constant 0 : index
      %20 = vector.load %arg2[%c0_9, %c0_10, %c0_11] : memref<1x8x128xf32, #tpu.memory_space<vmem>>, vector<1x8x128xf32>
      tpu.vector_store %arg2[%c0_9, %c0_10, %c0_11], %19 {strides = array<i32>} : memref<1x8x128xf32, #tpu.memory_space<vmem>>, vector<1x8x128xf32>,
    } else {
    }
    %c0 = arith.constant 0 : index
    %c0_1 = arith.constant 0 : index
    %3 = vector.load %arg1[%c0, %c0_1] : memref<1000x64xf32, #tpu.memory_space<vmem>>, vector<1000x64xf32>
    %4 = arith.mulf %3, %3 : vector<1000x64xf32>
    %cst = arith.constant dense<0.000000e+00> : vector<1000xf32>
    %5 = vector.multi_reduction <add>, %4, %cst [1] : vector<1000x64xf32> to vector<1000xf32>
    %6 = vector.shape_cast %5 : vector<1000xf32> to vector<1000x1xf32>
    %cst_2 = arith.constant 1.000000e+00 : f32
    %7 = vector.broadcast %cst_2 : f32 to vector<1000x1xf32>
    %8 = arith.subf %6, %7 : vector<1000x1xf32>
    %cst_3 = arith.constant 0.000000e+00 : f32
    %9 = vector.broadcast %cst_3 : f32 to vector<1000x1xf32>
    %10 = arith.maximumf %8, %9 : vector<1000x1xf32>
    %c1000_i32 = arith.constant 1000 : i32
    %11 = arith.muli %arg0, %c1000_i32 : i32
    %c1000_i32_4 = arith.constant 1000 : i32
    %12 = arith.addi %11, %c1000_i32_4 : i32
    %c1000_i32_5 = arith.constant 1000 : i32
    %13 = arith.cmpi sgt, %12, %c1000_i32_5 : i32
    %true = arith.constant true
    %14 = arith.xori %13, %true : i1
    %15 = arith.extui %14 : i1 to i32
    %c0_i32_6 = arith.constant 0 : i32
    %16 = arith.cmpi ne, %15, %c0_i32_6 : i32
    scf.if %16 {
      %c0_8 = arith.constant 0 : index
      %c0_9 = arith.constant 0 : index
      %c0_10 = arith.constant 0 : index
      %19 = vector.load %arg2[%c0_8, %c0_9, %c0_10] : memref<1x8x128xf32, #tpu.memory_space<vmem>>, vector<1x8x128xf32>
      %20 = vector.shape_cast %10 : vector<1000x1xf32> to vector<1x1000x1xf32>
      %cst_11 = arith.constant dense<0.000000e+00> : vector<1xf32>
      %21 = vector.multi_reduction <add>, %20, %cst_11 [1, 2] : vector<1x1000x1xf32> to vector<1xf32>
      %22 = vector.shape_cast %21 : vector<1xf32> to vector<1x1x1xf32>
      %23 = vector.extract %22[0, 0, 0] : f32 from vector<1x1x1xf32>
      %24 = vector.broadcast %23 : f32 to vector<1x8x128xf32>
      %25 = arith.addf %19, %24 : vector<1x8x128xf32>
      %c0_12 = arith.constant 0 : index
      %c0_13 = arith.constant 0 : index
      %c0_14 = arith.constant 0 : index
      %26 = vector.load %arg2[%c0_12, %c0_13, %c0_14] : memref<1x8x128xf32, #tpu.memory_space<vmem>>, vector<1x8x128xf32>
      tpu.vector_store %arg2[%c0_12, %c0_13, %c0_14], %25 {strides = array<i32>} : memref<1x8x128xf32, #tpu.memory_space<vmem>>, vector<1x8x128xf32>,
    } else {
    }
    %17 = arith.extui %13 : i1 to i32
    %c0_i32_7 = arith.constant 0 : i32
    %18 = arith.cmpi ne, %17, %c0_i32_7 : i32
    scf.if %18 {
      %19 = tpu.iota {dimensions = array<i32: 0>} : vector<1000x1xi32>
      %20 = vector.broadcast %11 : i32 to vector<1000x1xi32>
      %21 = arith.addi %20, %19 : vector<1000x1xi32>
      %c0_8 = arith.constant 0 : index
      %c0_9 = arith.constant 0 : index
      %c0_10 = arith.constant 0 : index
      %22 = vector.load %arg2[%c0_8, %c0_9, %c0_10] : memref<1x8x128xf32, #tpu.memory_space<vmem>>, vector<1x8x128xf32>
      %c1000_i32_11 = arith.constant 1000 : i32
      %23 = vector.broadcast %c1000_i32_11 : i32 to vector<1000x1xi32>
      %24 = arith.cmpi slt, %21, %23 : vector<1000x1xi32>
      %cst_12 = arith.constant 0.000000e+00 : f32
      %25 = vector.broadcast %cst_12 : f32 to vector<1000x1xf32>
      %26 = arith.select %24, %10, %25 : vector<1000x1xi1>, vector<1000x1xf32>
      %27 = vector.shape_cast %26 : vector<1000x1xf32> to vector<1x1000x1xf32>
      %cst_13 = arith.constant dense<0.000000e+00> : vector<1xf32>
      %28 = vector.multi_reduction <add>, %27, %cst_13 [1, 2] : vector<1x1000x1xf32> to vector<1xf32>
      %29 = vector.shape_cast %28 : vector<1xf32> to vector<1x1x1xf32>
      %30 = vector.extract %29[0, 0, 0] : f32 from vector<1x1x1xf32>
      %31 = vector.broadcast %30 : f32 to vector<1x8x128xf32>
      %32 = arith.addf %22, %31 : vector<1x8x128xf32>
      %c0_14 = arith.constant 0 : index
      %c0_15 = arith.constant 0 : index
      %c0_16 = arith.constant 0 : index
      %33 = vector.load %arg2[%c0_14, %c0_15, %c0_16] : memref<1x8x128xf32, #tpu.memory_space<vmem>>, vector<1x8x128xf32>
      tpu.vector_store %arg2[%c0_14, %c0_15, %c0_16], %32 {strides = array<i32>} : memref<1x8x128xf32, #tpu.memory_space<vmem>>, vector<1x8x128xf32>,
    } else {
    }
    return
  }
  func.func @transform_0(%arg0: i32) -> (i32, i32) {
    %c0_i32 = arith.constant 0 : i32
    %c0_i32_0 = arith.constant 0 : i32
    return %arg0, %c0_i32 : i32, i32
  }
  func.func @transform_1(%arg0: i32) -> (i32, i32, i32) {
    %c0_i32 = arith.constant 0 : i32
    %c0_i32_0 = arith.constant 0 : i32
    %c0_i32_1 = arith.constant 0 : i32
    %c0_i32_2 = arith.constant 0 : i32
    return %c0_i32, %c0_i32_0, %c0_i32_1 : i32, i32, i32
  }
}

</mosaic_0001>

<llo_original>
// kernel: tpu_custom_call.1
$region0: #{tpu_custom_call.1}
  #allocation0 [shape = 'u32[]', space=smem, size = 0x4, offset = 0x4, fixed_abs, tag = 'smem constant byte address 0x4 - core index']
  #allocation1 [shape = 'u32[144,128]{1,0:T(1,128)}', space=vmem, size = 0x12000, scoped, tag = 'internal scratch']
  %s0 = inlined_call_operand.vmem [shape: f32[1000,64], index: 0, kind: input, shape index: {}]
  %s1 = inlined_call_operand.hbm [shape: f32[1,8,128], index: 1, kind: output, shape index: {}]
  %s2 = sld [smem:[#allocation0]]
  $region26: #{tpu_custom_call.1} parent=0
    _
  %s4 = ssub.s32 1, %s2
  %s5 = scalar_select 0, %s4, %s2
  $region1: #{tpu_custom_call.1} parent=0
    #allocation2 [shape = 'u8[4096]{0}', space=vmem, size = 0x1000, scoped, tag = 'output window, operand 0, single buffered']
    #allocation3 [shape = 's32[1]{0}', space=sflag, size = 0x4, scoped, tag = 'scoped memory for tpu_custom_call.1']
    %6 = vsyncpa [#allocation3], 0
    // Predicated region
    $region2: #{tpu_custom_call.1} parent=1 // pred_check
      _
    $region3: #{tpu_custom_call.1} parent=1 // pred_check_branch
      %8 = sbr.rel (0) target = $region5
    $region4: #{tpu_custom_call.1} parent=1 // pred_region
      _
    $region5: #{tpu_custom_call.1} parent=1 // pred_fallthru
      _
    %p9 = scmp.eq.s32.totalorder 0, 0
    // Predicated region
    $region6: #{tpu_custom_call.1} parent=1 // pred_check
      %p10 = pneg %p9
    $region7: #{tpu_custom_call.1} parent=1 // pred_check_branch
      %12 = sbr.rel (%p10) target = $region9
    $region8: #{tpu_custom_call.1} parent=1 // pred_region
      %13 = vst [vmem:[#allocation2] sm:$0xff] 0.0
    $region9: #{tpu_custom_call.1} parent=1 // pred_fallthru
      _
    %v14 = vld [vmem:[%s0] sm:$0xff]
    %v15 = vld [vmem:[%s0 + $0x8] sm:$0xff]
    %v16 = vld [vmem:[%s0 + $0x10] sm:$0xff]
    %v17 = vld [vmem:[%s0 + $0x18] sm:$0xff]
    %v18 = vld [vmem:[%s0 + $0x20] sm:$0xff]
    %v19 = vld [vmem:[%s0 + $0x28] sm:$0xff]
    %v20 = vld [vmem:[%s0 + $0x30] sm:$0xff]
    %v21 = vld [vmem:[%s0 + $0x38] sm:$0xff]
    %v22 = vld [vmem:[%s0 + $0x40] sm:$0xff]
    %v23 = vld [vmem:[%s0 + $0x48] sm:$0xff]
    %v24 = vld [vmem:[%s0 + $0x50] sm:$0xff]
    %v25 = vld [vmem:[%s0 + $0x58] sm:$0xff]
    %v26 = vld [vmem:[%s0 + $0x60] sm:$0xff]
    %v27 = vld [vmem:[%s0 + $0x68] sm:$0xff]
    %v28 = vld [vmem:[%s0 + $0x70] sm:$0xff]
    %v29 = vld [vmem:[%s0 + $0x78] sm:$0xff]
    %v30 = vld [vmem:[%s0 + $0x80] sm:$0xff]
    %v31 = vld [vmem:[%s0 + $0x88] sm:$0xff]
    %v32 = vld [vmem:[%s0 + $0x90] sm:$0xff]
    %v33 = vld [vmem:[%s0 + $0x98] sm:$0xff]
    %v34 = vld [vmem:[%s0 + $0xa0] sm:$0xff]
    %v35 = vld [vmem:[%s0 + $0xa8] sm:$0xff]
    %v36 = vld [vmem:[%s0 + $0xb0] sm:$0xff]
    %v37 = vld [vmem:[%s0 + $0xb8] sm:$0xff]
    %v38 = vld [vmem:[%s0 + $0xc0] sm:$0xff]
    %v39 = vld [vmem:[%s0 + $0xc8] sm:$0xff]
    %v40 = vld [vmem:[%s0 + $0xd0] sm:$0xff]
    %v41 = vld [vmem:[%s0 + $0xd8] sm:$0xff]
    %v42 = vld [vmem:[%s0 + $0xe0] sm:$0xff]
    %v43 = vld [vmem:[%s0 + $0xe8] sm:$0xff]
    %v44 = vld [vmem:[%s0 + $0xf0] sm:$0xff]
    %v45 = vld [vmem:[%s0 + $0xf8] sm:$0xff]
    %v46 = vld [vmem:[%s0 + $0x100] sm:$0xff]
    %v47 = vld [vmem:[%s0 + $0x108] sm:$0xff]
    %v48 = vld [vmem:[%s0 + $0x110] sm:$0xff]
    %v49 = vld [vmem:[%s0 + $0x118] sm:$0xff]
    %v50 = vld [vmem:[%s0 + $0x120] sm:$0xff]
    %v51 = vld [vmem:[%s0 + $0x128] sm:$0xff]
    %v52 = vld [vmem:[%s0 + $0x130] sm:$0xff]
    %v53 = vld [vmem:[%s0 + $0x138] sm:$0xff]
    %v54 = vld [vmem:[%s0 + $0x140] sm:$0xff]
    %v55 = vld [vmem:[%s0 + $0x148] sm:$0xff]
    %v56 = vld [vmem:[%s0 + $0x150] sm:$0xff]
    %v57 = vld [vmem:[%s0 + $0x158] sm:$0xff]
    %v58 = vld [vmem:[%s0 + $0x160] sm:$0xff]
    %v59 = vld [vmem:[%s0 + $0x168] sm:$0xff]
    %v60 = vld [vmem:[%s0 + $0x170] sm:$0xff]
    %v61 = vld [vmem:[%s0 + $0x178] sm:$0xff]
    %v62 = vld [vmem:[%s0 + $0x180] sm:$0xff]
    %v63 = vld [vmem:[%s0 + $0x188] sm:$0xff]
    %v64 = vld [vmem:[%s0 + $0x190] sm:$0xff]
    %v65 = vld [vmem:[%s0 + $0x198] sm:$0xff]
    %v66 = vld [vmem:[%s0 + $0x1a0] sm:$0xff]
    %v67 = vld [vmem:[%s0 + $0x1a8] sm:$0xff]
    %v68 = vld [vmem:[%s0 + $0x1b0] sm:$0xff]
    %v69 = vld [vmem:[%s0 + $0x1b8] sm:$0xff]
    %v70 = vld [vmem:[%s0 + $0x1c0] sm:$0xff]
    %v71 = vld [vmem:[%s0 + $0x1c8] sm:$0xff]
    %v72 = vld [vmem:[%s0 + $0x1d0] sm:$0xff]
    %v73 = vld [vmem:[%s0 + $0x1d8] sm:$0xff]
    %v74 = vld [vmem:[%s0 + $0x1e0] sm:$0xff]
    %v75 = vld [vmem:[%s0 + $0x1e8] sm:$0xff]
    %v76 = vld [vmem:[%s0 + $0x1f0] sm:$0xff]
    %v77 = vld [vmem:[%s0 + $0x1f8] sm:$0xff]
    %v78 = vld [vmem:[%s0 + $0x200] sm:$0xff]
    %v79 = vld [vmem:[%s0 + $0x208] sm:$0xff]
    %v80 = vld [vmem:[%s0 + $0x210] sm:$0xff]
    %v81 = vld [vmem:[%s0 + $0x218] sm:$0xff]
    %v82 = vld [vmem:[%s0 + $0x220] sm:$0xff]
    %v83 = vld [vmem:[%s0 + $0x228] sm:$0xff]
    %v84 = vld [vmem:[%s0 + $0x230] sm:$0xff]
    %v85 = vld [vmem:[%s0 + $0x238] sm:$0xff]
    %v86 = vld [vmem:[%s0 + $0x240] sm:$0xff]
    %v87 = vld [vmem:[%s0 + $0x248] sm:$0xff]
    %v88 = vld [vmem:[%s0 + $0x250] sm:$0xff]
    %v89 = vld [vmem:[%s0 + $0x258] sm:$0xff]
    %v90 = vld [vmem:[%s0 + $0x260] sm:$0xff]
    %v91 = vld [vmem:[%s0 + $0x268] sm:$0xff]
    %v92 = vld [vmem:[%s0 + $0x270] sm:$0xff]
    %v93 = vld [vmem:[%s0 + $0x278] sm:$0xff]
    %v94 = vld [vmem:[%s0 + $0x280] sm:$0xff]
    %v95 = vld [vmem:[%s0 + $0x288] sm:$0xff]
    %v96 = vld [vmem:[%s0 + $0x290] sm:$0xff]
    %v97 = vld [vmem:[%s0 + $0x298] sm:$0xff]
    %v98 = vld [vmem:[%s0 + $0x2a0] sm:$0xff]
    %v99 = vld [vmem:[%s0 + $0x2a8] sm:$0xff]
    %v100 = vld [vmem:[%s0 + $0x2b0] sm:$0xff]
    %v101 = vld [vmem:[%s0 + $0x2b8] sm:$0xff]
    %v102 = vld [vmem:[%s0 + $0x2c0] sm:$0xff]
    %v103 = vld [vmem:[%s0 + $0x2c8] sm:$0xff]
    %v104 = vld [vmem:[%s0 + $0x2d0] sm:$0xff]
    %v105 = vld [vmem:[%s0 + $0x2d8] sm:$0xff]
    %v106 = vld [vmem:[%s0 + $0x2e0] sm:$0xff]
    %v107 = vld [vmem:[%s0 + $0x2e8] sm:$0xff]
    %v108 = vld [vmem:[%s0 + $0x2f0] sm:$0xff]
    %v109 = vld [vmem:[%s0 + $0x2f8] sm:$0xff]
    %v110 = vld [vmem:[%s0 + $0x300] sm:$0xff]
    %v111 = vld [vmem:[%s0 + $0x308] sm:$0xff]
    %v112 = vld [vmem:[%s0 + $0x310] sm:$0xff]
    %v113 = vld [vmem:[%s0 + $0x318] sm:$0xff]
    %v114 = vld [vmem:[%s0 + $0x320] sm:$0xff]
    %v115 = vld [vmem:[%s0 + $0x328] sm:$0xff]
    %v116 = vld [vmem:[%s0 + $0x330] sm:$0xff]
    %v117 = vld [vmem:[%s0 + $0x338] sm:$0xff]
    %v118 = vld [vmem:[%s0 + $0x340] sm:$0xff]
    %v119 = vld [vmem:[%s0 + $0x348] sm:$0xff]
    %v120 = vld [vmem:[%s0 + $0x350] sm:$0xff]
    %v121 = vld [vmem:[%s0 + $0x358] sm:$0xff]
    %v122 = vld [vmem:[%s0 + $0x360] sm:$0xff]
    %v123 = vld [vmem:[%s0 + $0x368] sm:$0xff]
    %v124 = vld [vmem:[%s0 + $0x370] sm:$0xff]
    %v125 = vld [vmem:[%s0 + $0x378] sm:$0xff]
    %v126 = vld [vmem:[%s0 + $0x380] sm:$0xff]
    %v127 = vld [vmem:[%s0 + $0x388] sm:$0xff]
    %v128 = vld [vmem:[%s0 + $0x390] sm:$0xff]
    %v129 = vld [vmem:[%s0 + $0x398] sm:$0xff]
    %v130 = vld [vmem:[%s0 + $0x3a0] sm:$0xff]
    %v131 = vld [vmem:[%s0 + $0x3a8] sm:$0xff]
    %v132 = vld [vmem:[%s0 + $0x3b0] sm:$0xff]
    %v133 = vld [vmem:[%s0 + $0x3b8] sm:$0xff]
    %v134 = vld [vmem:[%s0 + $0x3c0] sm:$0xff]
    %v135 = vld [vmem:[%s0 + $0x3c8] sm:$0xff]
    %v136 = vld [vmem:[%s0 + $0x3d0] sm:$0xff]
    %v137 = vld [vmem:[%s0 + $0x3d8] sm:$0xff]
    %v138 = vld [vmem:[%s0 + $0x3e0] sm:$0xff]
    %v139 = vmul.f32 %v14, %v14
    %v140 = vmul.f32 %v15, %v15
    %v141 = vmul.f32 %v16, %v16
    %v142 = vmul.f32 %v17, %v17
    %v143 = vmul.f32 %v18, %v18
    %v144 = vmul.f32 %v19, %v19
    %v145 = vmul.f32 %v20, %v20
    %v146 = vmul.f32 %v21, %v21
    %v147 = vmul.f32 %v22, %v22
    %v148 = vmul.f32 %v23, %v23
    %v149 = vmul.f32 %v24, %v24
    %v150 = vmul.f32 %v25, %v25
    %v151 = vmul.f32 %v26, %v26
    %v152 = vmul.f32 %v27, %v27
    %v153 = vmul.f32 %v28, %v28
    %v154 = vmul.f32 %v29, %v29
    %v155 = vmul.f32 %v30, %v30
    %v156 = vmul.f32 %v31, %v31
    %v157 = vmul.f32 %v32, %v32
    %v158 = vmul.f32 %v33, %v33
    %v159 = vmul.f32 %v34, %v34
    %v160 = vmul.f32 %v35, %v35
    %v161 = vmul.f32 %v36, %v36
    %v162 = vmul.f32 %v37, %v37
    %v163 = vmul.f32 %v38, %v38
    %v164 = vmul.f32 %v39, %v39
    %v165 = vmul.f32 %v40, %v40
    %v166 = vmul.f32 %v41, %v41
    %v167 = vmul.f32 %v42, %v42
    %v168 = vmul.f32 %v43, %v43
    %v169 = vmul.f32 %v44, %v44
    %v170 = vmul.f32 %v45, %v45
    %v171 = vmul.f32 %v46, %v46
    %v172 = vmul.f32 %v47, %v47
    %v173 = vmul.f32 %v48, %v48
    %v174 = vmul.f32 %v49, %v49
    %v175 = vmul.f32 %v50, %v50
    %v176 = vmul.f32 %v51, %v51
    %v177 = vmul.f32 %v52, %v52
    %v178 = vmul.f32 %v53, %v53
    %v179 = vmul.f32 %v54, %v54
    %v180 = vmul.f32 %v55, %v55
    %v181 = vmul.f32 %v56, %v56
    %v182 = vmul.f32 %v57, %v57
    %v183 = vmul.f32 %v58, %v58
    %v184 = vmul.f32 %v59, %v59
    %v185 = vmul.f32 %v60, %v60
    %v186 = vmul.f32 %v61, %v61
    %v187 = vmul.f32 %v62, %v62
    %v188 = vmul.f32 %v63, %v63
    %v189 = vmul.f32 %v64, %v64
    %v190 = vmul.f32 %v65, %v65
    %v191 = vmul.f32 %v66, %v66
    %v192 = vmul.f32 %v67, %v67
    %v193 = vmul.f32 %v68, %v68
    %v194 = vmul.f32 %v69, %v69
    %v195 = vmul.f32 %v70, %v70
    %v196 = vmul.f32 %v71, %v71
    %v197 = vmul.f32 %v72, %v72
    %v198 = vmul.f32 %v73, %v73
    %v199 = vmul.f32 %v74, %v74
    %v200 = vmul.f32 %v75, %v75
    %v201 = vmul.f32 %v76, %v76
    %v202 = vmul.f32 %v77, %v77
    %v203 = vmul.f32 %v78, %v78
    %v204 = vmul.f32 %v79, %v79
    %v205 = vmul.f32 %v80, %v80
    %v206 = vmul.f32 %v81, %v81
    %v207 = vmul.f32 %v82, %v82
    %v208 = vmul.f32 %v83, %v83
    %v209 = vmul.f32 %v84, %v84
    %v210 = vmul.f32 %v85, %v85
    %v211 = vmul.f32 %v86, %v86
    %v212 = vmul.f32 %v87, %v87
    %v213 = vmul.f32 %v88, %v88
    %v214 = vmul.f32 %v89, %v89
    %v215 = vmul.f32 %v90, %v90
    %v216 = vmul.f32 %v91, %v91
    %v217 = vmul.f32 %v92, %v92
    %v218 = vmul.f32 %v93, %v93
    %v219 = vmul.f32 %v94, %v94
    %v220 = vmul.f32 %v95, %v95
    %v221 = vmul.f32 %v96, %v96
    %v222 = vmul.f32 %v97, %v97
    %v223 = vmul.f32 %v98, %v98
    %v224 = vmul.f32 %v99, %v99
    %v225 = vmul.f32 %v100, %v100
    %v226 = vmul.f32 %v101, %v101
    %v227 = vmul.f32 %v102, %v102
    %v228 = vmul.f32 %v103, %v103
    %v229 = vmul.f32 %v104, %v104
    %v230 = vmul.f32 %v105, %v105
    %v231 = vmul.f32 %v106, %v106
    %v232 = vmul.f32 %v107, %v107
    %v233 = vmul.f32 %v108, %v108
    %v234 = vmul.f32 %v109, %v109
    %v235 = vmul.f32 %v110, %v110
    %v236 = vmul.f32 %v111, %v111
    %v237 = vmul.f32 %v112, %v112
    %v238 = vmul.f32 %v113, %v113
    %v239 = vmul.f32 %v114, %v114
    %v240 = vmul.f32 %v115, %v115
    %v241 = vmul.f32 %v116, %v116
    %v242 = vmul.f32 %v117, %v117
    %v243 = vmul.f32 %v118, %v118
    %v244 = vmul.f32 %v119, %v119
    %v245 = vmul.f32 %v120, %v120
    %v246 = vmul.f32 %v121, %v121
    %v247 = vmul.f32 %v122, %v122
    %v248 = vmul.f32 %v123, %v123
    %v249 = vmul.f32 %v124, %v124
    %v250 = vmul.f32 %v125, %v125
    %v251 = vmul.f32 %v126, %v126
    %v252 = vmul.f32 %v127, %v127
    %v253 = vmul.f32 %v128, %v128
    %v254 = vmul.f32 %v129, %v129
    %v255 = vmul.f32 %v130, %v130
    %v256 = vmul.f32 %v131, %v131
    %v257 = vmul.f32 %v132, %v132
    %v258 = vmul.f32 %v133, %v133
    %v259 = vmul.f32 %v134, %v134
    %v260 = vmul.f32 %v135, %v135
    %v261 = vmul.f32 %v136, %v136
    %v262 = vmul.f32 %v137, %v137
    %v263 = vmul.f32 %v138, %v138
    %vm264 = vcmask 523264
    %v265 = vsel %vm264, %v139, 0.0
    %266 = vadd.xlane.f32.xlu0 %v265
    %v267 = vpop.xlane.xlu0 %266
    %v268 = vsel %vm264, %v140, 0.0
    %269 = vadd.xlane.f32.xlu0 %v268
    %v270 = vpop.xlane.xlu0 %269
    %v271 = vsel %vm264, %v141, 0.0
    %272 = vadd.xlane.f32.xlu0 %v271
    %v273 = vpop.xlane.xlu0 %272
    %v274 = vsel %vm264, %v142, 0.0
    %275 = vadd.xlane.f32.xlu0 %v274
    %v276 = vpop.xlane.xlu0 %275
    %v277 = vsel %vm264, %v143, 0.0
    %278 = vadd.xlane.f32.xlu0 %v277
    %v279 = vpop.xlane.xlu0 %278
    %v280 = vsel %vm264, %v144, 0.0
    %281 = vadd.xlane.f32.xlu0 %v280
    %v282 = vpop.xlane.xlu0 %281
    %v283 = vsel %vm264, %v145, 0.0
    %284 = vadd.xlane.f32.xlu0 %v283
    %v285 = vpop.xlane.xlu0 %284
    %v286 = vsel %vm264, %v146, 0.0
    %287 = vadd.xlane.f32.xlu0 %v286
    %v288 = vpop.xlane.xlu0 %287
    %v289 = vsel %vm264, %v147, 0.0
    %290 = vadd.xlane.f32.xlu0 %v289
    %v291 = vpop.xlane.xlu0 %290
    %v292 = vsel %vm264, %v148, 0.0
    %293 = vadd.xlane.f32.xlu0 %v292
    %v294 = vpop.xlane.xlu0 %293
    %v295 = vsel %vm264, %v149, 0.0
    %296 = vadd.xlane.f32.xlu0 %v295
    %v297 = vpop.xlane.xlu0 %296
    %v298 = vsel %vm264, %v150, 0.0
    %299 = vadd.xlane.f32.xlu0 %v298
    %v300 = vpop.xlane.xlu0 %299
    %v301 = vsel %vm264, %v151, 0.0
    %302 = vadd.xlane.f32.xlu0 %v301
    %v303 = vpop.xlane.xlu0 %302
    %v304 = vsel %vm264, %v152, 0.0
    %305 = vadd.xlane.f32.xlu0 %v304
    %v306 = vpop.xlane.xlu0 %305
    %v307 = vsel %vm264, %v153, 0.0
    %308 = vadd.xlane.f32.xlu0 %v307
    %v309 = vpop.xlane.xlu0 %308
    %v310 = vsel %vm264, %v154, 0.0
    %311 = vadd.xlane.f32.xlu0 %v310
    %v312 = vpop.xlane.xlu0 %311
    %v313 = vsel %vm264, %v155, 0.0
    %314 = vadd.xlane.f32.xlu0 %v313
    %v315 = vpop.xlane.xlu0 %314
    %v316 = vsel %vm264, %v156, 0.0
    %317 = vadd.xlane.f32.xlu0 %v316
    %v318 = vpop.xlane.xlu0 %317
    %v319 = vsel %vm264, %v157, 0.0
    %320 = vadd.xlane.f32.xlu0 %v319
    %v321 = vpop.xlane.xlu0 %320
    %v322 = vsel %vm264, %v158, 0.0
    %323 = vadd.xlane.f32.xlu0 %v322
    %v324 = vpop.xlane.xlu0 %323
    %v325 = vsel %vm264, %v159, 0.0
    %326 = vadd.xlane.f32.xlu0 %v325
    %v327 = vpop.xlane.xlu0 %326
    %v328 = vsel %vm264, %v160, 0.0
    %329 = vadd.xlane.f32.xlu0 %v328
    %v330 = vpop.xlane.xlu0 %329
    %v331 = vsel %vm264, %v161, 0.0
    %332 = vadd.xlane.f32.xlu0 %v331
    %v333 = vpop.xlane.xlu0 %332
    %v334 = vsel %vm264, %v162, 0.0
    %335 = vadd.xlane.f32.xlu0 %v334
    %v336 = vpop.xlane.xlu0 %335
    %v337 = vsel %vm264, %v163, 0.0
    %338 = vadd.xlane.f32.xlu0 %v337
    %v339 = vpop.xlane.xlu0 %338
    %v340 = vsel %vm264, %v164, 0.0
    %341 = vadd.xlane.f32.xlu0 %v340
    %v342 = vpop.xlane.xlu0 %341
    %v343 = vsel %vm264, %v165, 0.0
    %344 = vadd.xlane.f32.xlu0 %v343
    %v345 = vpop.xlane.xlu0 %344
    %v346 = vsel %vm264, %v166, 0.0
    %347 = vadd.xlane.f32.xlu0 %v346
    %v348 = vpop.xlane.xlu0 %347
    %v349 = vsel %vm264, %v167, 0.0
    %350 = vadd.xlane.f32.xlu0 %v349
    %v351 = vpop.xlane.xlu0 %350
    %v352 = vsel %vm264, %v168, 0.0
    %353 = vadd.xlane.f32.xlu0 %v352
    %v354 = vpop.xlane.xlu0 %353
    %v355 = vsel %vm264, %v169, 0.0
    %356 = vadd.xlane.f32.xlu0 %v355
    %v357 = vpop.xlane.xlu0 %356
    %v358 = vsel %vm264, %v170, 0.0
    %359 = vadd.xlane.f32.xlu0 %v358
    %v360 = vpop.xlane.xlu0 %359
    %v361 = vsel %vm264, %v171, 0.0
    %362 = vadd.xlane.f32.xlu0 %v361
    %v363 = vpop.xlane.xlu0 %362
    %v364 = vsel %vm264, %v172, 0.0
    %365 = vadd.xlane.f32.xlu0 %v364
    %v366 = vpop.xlane.xlu0 %365
    %v367 = vsel %vm264, %v173, 0.0
    %368 = vadd.xlane.f32.xlu0 %v367
    %v369 = vpop.xlane.xlu0 %368
    %v370 = vsel %vm264, %v174, 0.0
    %371 = vadd.xlane.f32.xlu0 %v370
    %v372 = vpop.xlane.xlu0 %371
    %v373 = vsel %vm264, %v175, 0.0
    %374 = vadd.xlane.f32.xlu0 %v373
    %v375 = vpop.xlane.xlu0 %374
    %v376 = vsel %vm264, %v176, 0.0
    %377 = vadd.xlane.f32.xlu0 %v376
    %v378 = vpop.xlane.xlu0 %377
    %v379 = vsel %vm264, %v177, 0.0
    %380 = vadd.xlane.f32.xlu0 %v379
    %v381 = vpop.xlane.xlu0 %380
    %v382 = vsel %vm264, %v178, 0.0
    %383 = vadd.xlane.f32.xlu0 %v382
    %v384 = vpop.xlane.xlu0 %383
    %v385 = vsel %vm264, %v179, 0.0
    %386 = vadd.xlane.f32.xlu0 %v385
    %v387 = vpop.xlane.xlu0 %386
    %v388 = vsel %vm264, %v180, 0.0
    %389 = vadd.xlane.f32.xlu0 %v388
    %v390 = vpop.xlane.xlu0 %389
    %v391 = vsel %vm264, %v181, 0.0
    %392 = vadd.xlane.f32.xlu0 %v391
    %v393 = vpop.xlane.xlu0 %392
    %v394 = vsel %vm264, %v182, 0.0
    %395 = vadd.xlane.f32.xlu0 %v394
    %v396 = vpop.xlane.xlu0 %395
    %v397 = vsel %vm264, %v183, 0.0
    %398 = vadd.xlane.f32.xlu0 %v397
    %v399 = vpop.xlane.xlu0 %398
    %v400 = vsel %vm264, %v184, 0.0
    %401 = vadd.xlane.f32.xlu0 %v400
    %v402 = vpop.xlane.xlu0 %401
    %v403 = vsel %vm264, %v185, 0.0
    %404 = vadd.xlane.f32.xlu0 %v403
    %v405 = vpop.xlane.xlu0 %404
    %v406 = vsel %vm264, %v186, 0.0
    %407 = vadd.xlane.f32.xlu0 %v406
    %v408 = vpop.xlane.xlu0 %407
    %v409 = vsel %vm264, %v187, 0.0
    %410 = vadd.xlane.f32.xlu0 %v409
    %v411 = vpop.xlane.xlu0 %410
    %v412 = vsel %vm264, %v188, 0.0
    %413 = vadd.xlane.f32.xlu0 %v412
    %v414 = vpop.xlane.xlu0 %413
    %v415 = vsel %vm264, %v189, 0.0
    %416 = vadd.xlane.f32.xlu0 %v415
    %v417 = vpop.xlane.xlu0 %416
    %v418 = vsel %vm264, %v190, 0.0
    %419 = vadd.xlane.f32.xlu0 %v418
    %v420 = vpop.xlane.xlu0 %419
    %v421 = vsel %vm264, %v191, 0.0
    %422 = vadd.xlane.f32.xlu0 %v421
    %v423 = vpop.xlane.xlu0 %422
    %v424 = vsel %vm264, %v192, 0.0
    %425 = vadd.xlane.f32.xlu0 %v424
    %v426 = vpop.xlane.xlu0 %425
    %v427 = vsel %vm264, %v193, 0.0
    %428 = vadd.xlane.f32.xlu0 %v427
    %v429 = vpop.xlane.xlu0 %428
    %v430 = vsel %vm264, %v194, 0.0
    %431 = vadd.xlane.f32.xlu0 %v430
    %v432 = vpop.xlane.xlu0 %431
    %v433 = vsel %vm264, %v195, 0.0
    %434 = vadd.xlane.f32.xlu0 %v433
    %v435 = vpop.xlane.xlu0 %434
    %v436 = vsel %vm264, %v196, 0.0
    %437 = vadd.xlane.f32.xlu0 %v436
    %v438 = vpop.xlane.xlu0 %437
    %v439 = vsel %vm264, %v197, 0.0
    %440 = vadd.xlane.f32.xlu0 %v439
    %v441 = vpop.xlane.xlu0 %440
    %v442 = vsel %vm264, %v198, 0.0
    %443 = vadd.xlane.f32.xlu0 %v442
    %v444 = vpop.xlane.xlu0 %443
    %v445 = vsel %vm264, %v199, 0.0
    %446 = vadd.xlane.f32.xlu0 %v445
    %v447 = vpop.xlane.xlu0 %446
    %v448 = vsel %vm264, %v200, 0.0
    %449 = vadd.xlane.f32.xlu0 %v448
    %v450 = vpop.xlane.xlu0 %449
    %v451 = vsel %vm264, %v201, 0.0
    %452 = vadd.xlane.f32.xlu0 %v451
    %v453 = vpop.xlane.xlu0 %452
    %v454 = vsel %vm264, %v202, 0.0
    %455 = vadd.xlane.f32.xlu0 %v454
    %v456 = vpop.xlane.xlu0 %455
    %v457 = vsel %vm264, %v203, 0.0
    %458 = vadd.xlane.f32.xlu0 %v457
    %v459 = vpop.xlane.xlu0 %458
    %v460 = vsel %vm264, %v204, 0.0
    %461 = vadd.xlane.f32.xlu0 %v460
    %v462 = vpop.xlane.xlu0 %461
    %v463 = vsel %vm264, %v205, 0.0
    %464 = vadd.xlane.f32.xlu0 %v463
    %v465 = vpop.xlane.xlu0 %464
    %v466 = vsel %vm264, %v206, 0.0
    %467 = vadd.xlane.f32.xlu0 %v466
    %v468 = vpop.xlane.xlu0 %467
    %v469 = vsel %vm264, %v207, 0.0
    %470 = vadd.xlane.f32.xlu0 %v469
    %v471 = vpop.xlane.xlu0 %470
    %v472 = vsel %vm264, %v208, 0.0
    %473 = vadd.xlane.f32.xlu0 %v472
    %v474 = vpop.xlane.xlu0 %473
    %v475 = vsel %vm264, %v209, 0.0
    %476 = vadd.xlane.f32.xlu0 %v475
    %v477 = vpop.xlane.xlu0 %476
    %v478 = vsel %vm264, %v210, 0.0
    %479 = vadd.xlane.f32.xlu0 %v478
    %v480 = vpop.xlane.xlu0 %479
    %v481 = vsel %vm264, %v211, 0.0
    %482 = vadd.xlane.f32.xlu0 %v481
    %v483 = vpop.xlane.xlu0 %482
    %v484 = vsel %vm264, %v212, 0.0
    %485 = vadd.xlane.f32.xlu0 %v484
    %v486 = vpop.xlane.xlu0 %485
    %v487 = vsel %vm264, %v213, 0.0
    %488 = vadd.xlane.f32.xlu0 %v487
    %v489 = vpop.xlane.xlu0 %488
    %v490 = vsel %vm264, %v214, 0.0
    %491 = vadd.xlane.f32.xlu0 %v490
    %v492 = vpop.xlane.xlu0 %491
    %v493 = vsel %vm264, %v215, 0.0
    %494 = vadd.xlane.f32.xlu0 %v493
    %v495 = vpop.xlane.xlu0 %494
    %v496 = vsel %vm264, %v216, 0.0
    %497 = vadd.xlane.f32.xlu0 %v496
    %v498 = vpop.xlane.xlu0 %497
    %v499 = vsel %vm264, %v217, 0.0
    %500 = vadd.xlane.f32.xlu0 %v499
    %v501 = vpop.xlane.xlu0 %500
    %v502 = vsel %vm264, %v218, 0.0
    %503 = vadd.xlane.f32.xlu0 %v502
    %v504 = vpop.xlane.xlu0 %503
    %v505 = vsel %vm264, %v219, 0.0
    %506 = vadd.xlane.f32.xlu0 %v505
    %v507 = vpop.xlane.xlu0 %506
    %v508 = vsel %vm264, %v220, 0.0
    %509 = vadd.xlane.f32.xlu0 %v508
    %v510 = vpop.xlane.xlu0 %509
    %v511 = vsel %vm264, %v221, 0.0
    %512 = vadd.xlane.f32.xlu0 %v511
    %v513 = vpop.xlane.xlu0 %512
    %v514 = vsel %vm264, %v222, 0.0
    %515 = vadd.xlane.f32.xlu0 %v514
    %v516 = vpop.xlane.xlu0 %515
    %v517 = vsel %vm264, %v223, 0.0
    %518 = vadd.xlane.f32.xlu0 %v517
    %v519 = vpop.xlane.xlu0 %518
    %v520 = vsel %vm264, %v224, 0.0
    %521 = vadd.xlane.f32.xlu0 %v520
    %v522 = vpop.xlane.xlu0 %521
    %v523 = vsel %vm264, %v225, 0.0
    %524 = vadd.xlane.f32.xlu0 %v523
    %v525 = vpop.xlane.xlu0 %524
    %v526 = vsel %vm264, %v226, 0.0
    %527 = vadd.xlane.f32.xlu0 %v526
    %v528 = vpop.xlane.xlu0 %527
    %v529 = vsel %vm264, %v227, 0.0
    %530 = vadd.xlane.f32.xlu0 %v529
    %v531 = vpop.xlane.xlu0 %530
    %v532 = vsel %vm264, %v228, 0.0
    %533 = vadd.xlane.f32.xlu0 %v532
    %v534 = vpop.xlane.xlu0 %533
    %v535 = vsel %vm264, %v229, 0.0
    %536 = vadd.xlane.f32.xlu0 %v535
    %v537 = vpop.xlane.xlu0 %536
    %v538 = vsel %vm264, %v230, 0.0
    %539 = vadd.xlane.f32.xlu0 %v538
    %v540 = vpop.xlane.xlu0 %539
    %v541 = vsel %vm264, %v231, 0.0
    %542 = vadd.xlane.f32.xlu0 %v541
    %v543 = vpop.xlane.xlu0 %542
    %v544 = vsel %vm264, %v232, 0.0
    %545 = vadd.xlane.f32.xlu0 %v544
    %v546 = vpop.xlane.xlu0 %545
    %v547 = vsel %vm264, %v233, 0.0
    %548 = vadd.xlane.f32.xlu0 %v547
    %v549 = vpop.xlane.xlu0 %548
    %v550 = vsel %vm264, %v234, 0.0
    %551 = vadd.xlane.f32.xlu0 %v550
    %v552 = vpop.xlane.xlu0 %551
    %v553 = vsel %vm264, %v235, 0.0
    %554 = vadd.xlane.f32.xlu0 %v553
    %v555 = vpop.xlane.xlu0 %554
    %v556 = vsel %vm264, %v236, 0.0
    %557 = vadd.xlane.f32.xlu0 %v556
    %v558 = vpop.xlane.xlu0 %557
    %v559 = vsel %vm264, %v237, 0.0
    %560 = vadd.xlane.f32.xlu0 %v559
    %v561 = vpop.xlane.xlu0 %560
    %v562 = vsel %vm264, %v238, 0.0
    %563 = vadd.xlane.f32.xlu0 %v562
    %v564 = vpop.xlane.xlu0 %563
    %v565 = vsel %vm264, %v239, 0.0
    %566 = vadd.xlane.f32.xlu0 %v565
    %v567 = vpop.xlane.xlu0 %566
    %v568 = vsel %vm264, %v240, 0.0
    %569 = vadd.xlane.f32.xlu0 %v568
    %v570 = vpop.xlane.xlu0 %569
    %v571 = vsel %vm264, %v241, 0.0
    %572 = vadd.xlane.f32.xlu0 %v571
    %v573 = vpop.xlane.xlu0 %572
    %v574 = vsel %vm264, %v242, 0.0
    %575 = vadd.xlane.f32.xlu0 %v574
    %v576 = vpop.xlane.xlu0 %575
    %v577 = vsel %vm264, %v243, 0.0
    %578 = vadd.xlane.f32.xlu0 %v577
    %v579 = vpop.xlane.xlu0 %578
    %v580 = vsel %vm264, %v244, 0.0
    %581 = vadd.xlane.f32.xlu0 %v580
    %v582 = vpop.xlane.xlu0 %581
    %v583 = vsel %vm264, %v245, 0.0
    %584 = vadd.xlane.f32.xlu0 %v583
    %v585 = vpop.xlane.xlu0 %584
    %v586 = vsel %vm264, %v246, 0.0
    %587 = vadd.xlane.f32.xlu0 %v586
    %v588 = vpop.xlane.xlu0 %587
    %v589 = vsel %vm264, %v247, 0.0
    %590 = vadd.xlane.f32.xlu0 %v589
    %v591 = vpop.xlane.xlu0 %590
    %v592 = vsel %vm264, %v248, 0.0
    %593 = vadd.xlane.f32.xlu0 %v592
    %v594 = vpop.xlane.xlu0 %593
    %v595 = vsel %vm264, %v249, 0.0
    %596 = vadd.xlane.f32.xlu0 %v595
    %v597 = vpop.xlane.xlu0 %596
    %v598 = vsel %vm264, %v250, 0.0
    %599 = vadd.xlane.f32.xlu0 %v598
    %v600 = vpop.xlane.xlu0 %599
    %v601 = vsel %vm264, %v251, 0.0
    %602 = vadd.xlane.f32.xlu0 %v601
    %v603 = vpop.xlane.xlu0 %602
    %v604 = vsel %vm264, %v252, 0.0
    %605 = vadd.xlane.f32.xlu0 %v604
    %v606 = vpop.xlane.xlu0 %605
    %v607 = vsel %vm264, %v253, 0.0
    %608 = vadd.xlane.f32.xlu0 %v607
    %v609 = vpop.xlane.xlu0 %608
    %v610 = vsel %vm264, %v254, 0.0
    %611 = vadd.xlane.f32.xlu0 %v610
    %v612 = vpop.xlane.xlu0 %611
    %v613 = vsel %vm264, %v255, 0.0
    %614 = vadd.xlane.f32.xlu0 %v613
    %v615 = vpop.xlane.xlu0 %614
    %v616 = vsel %vm264, %v256, 0.0
    %617 = vadd.xlane.f32.xlu0 %v616
    %v618 = vpop.xlane.xlu0 %617
    %v619 = vsel %vm264, %v257, 0.0
    %620 = vadd.xlane.f32.xlu0 %v619
    %v621 = vpop.xlane.xlu0 %620
    %v622 = vsel %vm264, %v258, 0.0
    %623 = vadd.xlane.f32.xlu0 %v622
    %v624 = vpop.xlane.xlu0 %623
    %v625 = vsel %vm264, %v259, 0.0
    %626 = vadd.xlane.f32.xlu0 %v625
    %v627 = vpop.xlane.xlu0 %626
    %v628 = vsel %vm264, %v260, 0.0
    %629 = vadd.xlane.f32.xlu0 %v628
    %v630 = vpop.xlane.xlu0 %629
    %v631 = vsel %vm264, %v261, 0.0
    %632 = vadd.xlane.f32.xlu0 %v631
    %v633 = vpop.xlane.xlu0 %632
    %v634 = vsel %vm264, %v262, 0.0
    %635 = vadd.xlane.f32.xlu0 %v634
    %v636 = vpop.xlane.xlu0 %635
    %v637 = vsel %vm264, %v263, 0.0
    %638 = vadd.xlane.f32.xlu0 %v637
    %v639 = vpop.xlane.xlu0 %638
    %v640 = vsub.f32 %v267, 1.0
    %v641 = vsub.f32 %v270, 1.0
    %v642 = vsub.f32 %v273, 1.0
    %v643 = vsub.f32 %v276, 1.0
    %v644 = vsub.f32 %v279, 1.0
    %v645 = vsub.f32 %v282, 1.0
    %v646 = vsub.f32 %v285, 1.0
    %v647 = vsub.f32 %v288, 1.0
    %v648 = vsub.f32 %v291, 1.0
    %v649 = vsub.f32 %v294, 1.0
    %v650 = vsub.f32 %v297, 1.0
    %v651 = vsub.f32 %v300, 1.0
    %v652 = vsub.f32 %v303, 1.0
    %v653 = vsub.f32 %v306, 1.0
    %v654 = vsub.f32 %v309, 1.0
    %v655 = vsub.f32 %v312, 1.0
    %v656 = vsub.f32 %v315, 1.0
    %v657 = vsub.f32 %v318, 1.0
    %v658 = vsub.f32 %v321, 1.0
    %v659 = vsub.f32 %v324, 1.0
    %v660 = vsub.f32 %v327, 1.0
    %v661 = vsub.f32 %v330, 1.0
    %v662 = vsub.f32 %v333, 1.0
    %v663 = vsub.f32 %v336, 1.0
    %v664 = vsub.f32 %v339, 1.0
    %v665 = vsub.f32 %v342, 1.0
    %v666 = vsub.f32 %v345, 1.0
    %v667 = vsub.f32 %v348, 1.0
    %v668 = vsub.f32 %v351, 1.0
    %v669 = vsub.f32 %v354, 1.0
    %v670 = vsub.f32 %v357, 1.0
    %v671 = vsub.f32 %v360, 1.0
    %v672 = vsub.f32 %v363, 1.0
    %v673 = vsub.f32 %v366, 1.0
    %v674 = vsub.f32 %v369, 1.0
    %v675 = vsub.f32 %v372, 1.0
    %v676 = vsub.f32 %v375, 1.0
    %v677 = vsub.f32 %v378, 1.0
    %v678 = vsub.f32 %v381, 1.0
    %v679 = vsub.f32 %v384, 1.0
    %v680 = vsub.f32 %v387, 1.0
    %v681 = vsub.f32 %v390, 1.0
    %v682 = vsub.f32 %v393, 1.0
    %v683 = vsub.f32 %v396, 1.0
    %v684 = vsub.f32 %v399, 1.0
    %v685 = vsub.f32 %v402, 1.0
    %v686 = vsub.f32 %v405, 1.0
    %v687 = vsub.f32 %v408, 1.0
    %v688 = vsub.f32 %v411, 1.0
    %v689 = vsub.f32 %v414, 1.0
    %v690 = vsub.f32 %v417, 1.0
    %v691 = vsub.f32 %v420, 1.0
    %v692 = vsub.f32 %v423, 1.0
    %v693 = vsub.f32 %v426, 1.0
    %v694 = vsub.f32 %v429, 1.0
    %v695 = vsub.f32 %v432, 1.0
    %v696 = vsub.f32 %v435, 1.0
    %v697 = vsub.f32 %v438, 1.0
    %v698 = vsub.f32 %v441, 1.0
    %v699 = vsub.f32 %v444, 1.0
    %v700 = vsub.f32 %v447, 1.0
    %v701 = vsub.f32 %v450, 1.0
    %v702 = vsub.f32 %v453, 1.0
    %v703 = vsub.f32 %v456, 1.0
    %v704 = vsub.f32 %v459, 1.0
    %v705 = vsub.f32 %v462, 1.0
    %v706 = vsub.f32 %v465, 1.0
    %v707 = vsub.f32 %v468, 1.0
    %v708 = vsub.f32 %v471, 1.0
    %v709 = vsub.f32 %v474, 1.0
    %v710 = vsub.f32 %v477, 1.0
    %v711 = vsub.f32 %v480, 1.0
    %v712 = vsub.f32 %v483, 1.0
    %v713 = vsub.f32 %v486, 1.0
    %v714 = vsub.f32 %v489, 1.0
    %v715 = vsub.f32 %v492, 1.0
    %v716 = vsub.f32 %v495, 1.0
    %v717 = vsub.f32 %v498, 1.0
    %v718 = vsub.f32 %v501, 1.0
    %v719 = vsub.f32 %v504, 1.0
    %v720 = vsub.f32 %v507, 1.0
    %v721 = vsub.f32 %v510, 1.0
    %v722 = vsub.f32 %v513, 1.0
    %v723 = vsub.f32 %v516, 1.0
    %v724 = vsub.f32 %v519, 1.0
    %v725 = vsub.f32 %v522, 1.0
    %v726 = vsub.f32 %v525, 1.0
    %v727 = vsub.f32 %v528, 1.0
    %v728 = vsub.f32 %v531, 1.0
    %v729 = vsub.f32 %v534, 1.0
    %v730 = vsub.f32 %v537, 1.0
    %v731 = vsub.f32 %v540, 1.0
    %v732 = vsub.f32 %v543, 1.0
    %v733 = vsub.f32 %v546, 1.0
    %v734 = vsub.f32 %v549, 1.0
    %v735 = vsub.f32 %v552, 1.0
    %v736 = vsub.f32 %v555, 1.0
    %v737 = vsub.f32 %v558, 1.0
    %v738 = vsub.f32 %v561, 1.0
    %v739 = vsub.f32 %v564, 1.0
    %v740 = vsub.f32 %v567, 1.0
    %v741 = vsub.f32 %v570, 1.0
    %v742 = vsub.f32 %v573, 1.0
    %v743 = vsub.f32 %v576, 1.0
    %v744 = vsub.f32 %v579, 1.0
    %v745 = vsub.f32 %v582, 1.0
    %v746 = vsub.f32 %v585, 1.0
    %v747 = vsub.f32 %v588, 1.0
    %v748 = vsub.f32 %v591, 1.0
    %v749 = vsub.f32 %v594, 1.0
    %v750 = vsub.f32 %v597, 1.0
    %v751 = vsub.f32 %v600, 1.0
    %v752 = vsub.f32 %v603, 1.0
    %v753 = vsub.f32 %v606, 1.0
    %v754 = vsub.f32 %v609, 1.0
    %v755 = vsub.f32 %v612, 1.0
    %v756 = vsub.f32 %v615, 1.0
    %v757 = vsub.f32 %v618, 1.0
    %v758 = vsub.f32 %v621, 1.0
    %v759 = vsub.f32 %v624, 1.0
    %v760 = vsub.f32 %v627, 1.0
    %v761 = vsub.f32 %v630, 1.0
    %v762 = vsub.f32 %v633, 1.0
    %v763 = vsub.f32 %v636, 1.0
    %v764 = vsub.f32 %v639, 1.0
    %v765 = vmax.f32 %v640, 0.0
    %v766 = vmax.f32 %v641, 0.0
    %v767 = vmax.f32 %v642, 0.0
    %v768 = vmax.f32 %v643, 0.0
    %v769 = vmax.f32 %v644, 0.0
    %v770 = vmax.f32 %v645, 0.0
    %v771 = vmax.f32 %v646, 0.0
    %v772 = vmax.f32 %v647, 0.0
    %v773 = vmax.f32 %v648, 0.0
    %v774 = vmax.f32 %v649, 0.0
    %v775 = vmax.f32 %v650, 0.0
    %v776 = vmax.f32 %v651, 0.0
    %v777 = vmax.f32 %v652, 0.0
    %v778 = vmax.f32 %v653, 0.0
    %v779 = vmax.f32 %v654, 0.0
    %v780 = vmax.f32 %v655, 0.0
    %v781 = vmax.f32 %v656, 0.0
    %v782 = vmax.f32 %v657, 0.0
    %v783 = vmax.f32 %v658, 0.0
    %v784 = vmax.f32 %v659, 0.0
    %v785 = vmax.f32 %v660, 0.0
    %v786 = vmax.f32 %v661, 0.0
    %v787 = vmax.f32 %v662, 0.0
    %v788 = vmax.f32 %v663, 0.0
    %v789 = vmax.f32 %v664, 0.0
    %v790 = vmax.f32 %v665, 0.0
    %v791 = vmax.f32 %v666, 0.0
    %v792 = vmax.f32 %v667, 0.0
    %v793 = vmax.f32 %v668, 0.0
    %v794 = vmax.f32 %v669, 0.0
    %v795 = vmax.f32 %v670, 0.0
    %v796 = vmax.f32 %v671, 0.0
    %v797 = vmax.f32 %v672, 0.0
    %v798 = vmax.f32 %v673, 0.0
    %v799 = vmax.f32 %v674, 0.0
    %v800 = vmax.f32 %v675, 0.0
    %v801 = vmax.f32 %v676, 0.0
    %v802 = vmax.f32 %v677, 0.0
    %v803 = vmax.f32 %v678, 0.0
    %v804 = vmax.f32 %v679, 0.0
    %v805 = vmax.f32 %v680, 0.0
    %v806 = vmax.f32 %v681, 0.0
    %v807 = vmax.f32 %v682, 0.0
    %v808 = vmax.f32 %v683, 0.0
    %v809 = vmax.f32 %v684, 0.0
    %v810 = vmax.f32 %v685, 0.0
    %v811 = vmax.f32 %v686, 0.0
    %v812 = vmax.f32 %v687, 0.0
    %v813 = vmax.f32 %v688, 0.0
    %v814 = vmax.f32 %v689, 0.0
    %v815 = vmax.f32 %v690, 0.0
    %v816 = vmax.f32 %v691, 0.0
    %v817 = vmax.f32 %v692, 0.0
    %v818 = vmax.f32 %v693, 0.0
    %v819 = vmax.f32 %v694, 0.0
    %v820 = vmax.f32 %v695, 0.0
    %v821 = vmax.f32 %v696, 0.0
    %v822 = vmax.f32 %v697, 0.0
    %v823 = vmax.f32 %v698, 0.0
    %v824 = vmax.f32 %v699, 0.0
    %v825 = vmax.f32 %v700, 0.0
    %v826 = vmax.f32 %v701, 0.0
    %v827 = vmax.f32 %v702, 0.0
    %v828 = vmax.f32 %v703, 0.0
    %v829 = vmax.f32 %v704, 0.0
    %v830 = vmax.f32 %v705, 0.0
    %v831 = vmax.f32 %v706, 0.0
    %v832 = vmax.f32 %v707, 0.0
    %v833 = vmax.f32 %v708, 0.0
    %v834 = vmax.f32 %v709, 0.0
    %v835 = vmax.f32 %v710, 0.0
    %v836 = vmax.f32 %v711, 0.0
    %v837 = vmax.f32 %v712, 0.0
    %v838 = vmax.f32 %v713, 0.0
    %v839 = vmax.f32 %v714, 0.0
    %v840 = vmax.f32 %v715, 0.0
    %v841 = vmax.f32 %v716, 0.0
    %v842 = vmax.f32 %v717, 0.0
    %v843 = vmax.f32 %v718, 0.0
    %v844 = vmax.f32 %v719, 0.0
    %v845 = vmax.f32 %v720, 0.0
    %v846 = vmax.f32 %v721, 0.0
    %v847 = vmax.f32 %v722, 0.0
    %v848 = vmax.f32 %v723, 0.0
    %v849 = vmax.f32 %v724, 0.0
    %v850 = vmax.f32 %v725, 0.0
    %v851 = vmax.f32 %v726, 0.0
    %v852 = vmax.f32 %v727, 0.0
    %v853 = vmax.f32 %v728, 0.0
    %v854 = vmax.f32 %v729, 0.0
    %v855 = vmax.f32 %v730, 0.0
    %v856 = vmax.f32 %v731, 0.0
    %v857 = vmax.f32 %v732, 0.0
    %v858 = vmax.f32 %v733, 0.0
    %v859 = vmax.f32 %v734, 0.0
    %v860 = vmax.f32 %v735, 0.0
    %v861 = vmax.f32 %v736, 0.0
    %v862 = vmax.f32 %v737, 0.0
    %v863 = vmax.f32 %v738, 0.0
    %v864 = vmax.f32 %v739, 0.0
    %v865 = vmax.f32 %v740, 0.0
    %v866 = vmax.f32 %v741, 0.0
    %v867 = vmax.f32 %v742, 0.0
    %v868 = vmax.f32 %v743, 0.0
    %v869 = vmax.f32 %v744, 0.0
    %v870 = vmax.f32 %v745, 0.0
    %v871 = vmax.f32 %v746, 0.0
    %v872 = vmax.f32 %v747, 0.0
    %v873 = vmax.f32 %v748, 0.0
    %v874 = vmax.f32 %v749, 0.0
    %v875 = vmax.f32 %v750, 0.0
    %v876 = vmax.f32 %v751, 0.0
    %v877 = vmax.f32 %v752, 0.0
    %v878 = vmax.f32 %v753, 0.0
    %v879 = vmax.f32 %v754, 0.0
    %v880 = vmax.f32 %v755, 0.0
    %v881 = vmax.f32 %v756, 0.0
    %v882 = vmax.f32 %v757, 0.0
    %v883 = vmax.f32 %v758, 0.0
    %v884 = vmax.f32 %v759, 0.0
    %v885 = vmax.f32 %v760, 0.0
    %v886 = vmax.f32 %v761, 0.0
    %v887 = vmax.f32 %v762, 0.0
    %v888 = vmax.f32 %v763, 0.0
    %v889 = vmax.f32 %v764, 0.0
    %s890 = smul.u32 0, 1000
    %s891 = sadd.s32 %s890, 1000
    %p892 = scmp.gt.s32.totalorder %s891, 1000
    %p893 = scmp.le.s32.totalorder %s891, 1000
    // Predicated region
    $region10: #{tpu_custom_call.1} parent=1 // pred_check
      %p894 = pneg %p893
    $region11: #{tpu_custom_call.1} parent=1 // pred_check_branch
      %896 = sbr.rel (%p894) target = $region13
    $region12: #{tpu_custom_call.1} parent=1 // pred_region
      %v897 = vld [vmem:[#allocation2] sm:$0xff]
      %vm898 = vcmask 7168
      %v899 = vsel %vm898, %v765, 0.0
      %v900 = vsel %vm898, %v766, 0.0
      %v901 = vadd.f32 %v899, %v900
      %v902 = vsel %vm898, %v767, 0.0
      %v903 = vadd.f32 %v901, %v902
      %v904 = vsel %vm898, %v768, 0.0
      %v905 = vadd.f32 %v903, %v904
      %v906 = vsel %vm898, %v769, 0.0
      %v907 = vadd.f32 %v905, %v906
      %v908 = vsel %vm898, %v770, 0.0
      %v909 = vadd.f32 %v907, %v908
      %v910 = vsel %vm898, %v771, 0.0
      %v911 = vadd.f32 %v909, %v910
      %v912 = vsel %vm898, %v772, 0.0
      %v913 = vadd.f32 %v911, %v912
      %v914 = vsel %vm898, %v773, 0.0
      %v915 = vadd.f32 %v913, %v914
      %v916 = vsel %vm898, %v774, 0.0
      %v917 = vadd.f32 %v915, %v916
      %v918 = vsel %vm898, %v775, 0.0
      %v919 = vadd.f32 %v917, %v918
      %v920 = vsel %vm898, %v776, 0.0
      %v921 = vadd.f32 %v919, %v920
      %v922 = vsel %vm898, %v777, 0.0
      %v923 = vadd.f32 %v921, %v922
      %v924 = vsel %vm898, %v778, 0.0
      %v925 = vadd.f32 %v923, %v924
      %v926 = vsel %vm898, %v779, 0.0
      %v927 = vadd.f32 %v925, %v926
      %v928 = vsel %vm898, %v780, 0.0
      %v929 = vadd.f32 %v927, %v928
      %v930 = vsel %vm898, %v781, 0.0
      %v931 = vadd.f32 %v929, %v930
      %v932 = vsel %vm898, %v782, 0.0
      %v933 = vadd.f32 %v931, %v932
      %v934 = vsel %vm898, %v783, 0.0
      %v935 = vadd.f32 %v933, %v934
      %v936 = vsel %vm898, %v784, 0.0
      %v937 = vadd.f32 %v935, %v936
      %v938 = vsel %vm898, %v785, 0.0
      %v939 = vadd.f32 %v937, %v938
      %v940 = vsel %vm898, %v786, 0.0
      %v941 = vadd.f32 %v939, %v940
      %v942 = vsel %vm898, %v787, 0.0
      %v943 = vadd.f32 %v941, %v942
      %v944 = vsel %vm898, %v788, 0.0
      %v945 = vadd.f32 %v943, %v944
      %v946 = vsel %vm898, %v789, 0.0
      %v947 = vadd.f32 %v945, %v946
      %v948 = vsel %vm898, %v790, 0.0
      %v949 = vadd.f32 %v947, %v948
      %v950 = vsel %vm898, %v791, 0.0
      %v951 = vadd.f32 %v949, %v950
      %v952 = vsel %vm898, %v792, 0.0
      %v953 = vadd.f32 %v951, %v952
      %v954 = vsel %vm898, %v793, 0.0
      %v955 = vadd.f32 %v953, %v954
      %v956 = vsel %vm898, %v794, 0.0
      %v957 = vadd.f32 %v955, %v956
      %v958 = vsel %vm898, %v795, 0.0
      %v959 = vadd.f32 %v957, %v958
      %v960 = vsel %vm898, %v796, 0.0
      %v961 = vadd.f32 %v959, %v960
      %v962 = vsel %vm898, %v797, 0.0
      %v963 = vadd.f32 %v961, %v962
      %v964 = vsel %vm898, %v798, 0.0
      %v965 = vadd.f32 %v963, %v964
      %v966 = vsel %vm898, %v799, 0.0
      %v967 = vadd.f32 %v965, %v966
      %v968 = vsel %vm898, %v800, 0.0
      %v969 = vadd.f32 %v967, %v968
      %v970 = vsel %vm898, %v801, 0.0
      %v971 = vadd.f32 %v969, %v970
      %v972 = vsel %vm898, %v802, 0.0
      %v973 = vadd.f32 %v971, %v972
      %v974 = vsel %vm898, %v803, 0.0
      %v975 = vadd.f32 %v973, %v974
      %v976 = vsel %vm898, %v804, 0.0
      %v977 = vadd.f32 %v975, %v976
      %v978 = vsel %vm898, %v805, 0.0
      %v979 = vadd.f32 %v977, %v978
      %v980 = vsel %vm898, %v806, 0.0
      %v981 = vadd.f32 %v979, %v980
      %v982 = vsel %vm898, %v807, 0.0
      %v983 = vadd.f32 %v981, %v982
      %v984 = vsel %vm898, %v808, 0.0
      %v985 = vadd.f32 %v983, %v984
      %v986 = vsel %vm898, %v809, 0.0
      %v987 = vadd.f32 %v985, %v986
      %v988 = vsel %vm898, %v810, 0.0
      %v989 = vadd.f32 %v987, %v988
      %v990 = vsel %vm898, %v811, 0.0
      %v991 = vadd.f32 %v989, %v990
      %v992 = vsel %vm898, %v812, 0.0
      %v993 = vadd.f32 %v991, %v992
      %v994 = vsel %vm898, %v813, 0.0
      %v995 = vadd.f32 %v993, %v994
      %v996 = vsel %vm898, %v814, 0.0
      %v997 = vadd.f32 %v995, %v996
      %v998 = vsel %vm898, %v815, 0.0
      %v999 = vadd.f32 %v997, %v998
      %v1000 = vsel %vm898, %v816, 0.0
      %v1001 = vadd.f32 %v999, %v1000
      %v1002 = vsel %vm898, %v817, 0.0
      %v1003 = vadd.f32 %v1001, %v1002
      %v1004 = vsel %vm898, %v818, 0.0
      %v1005 = vadd.f32 %v1003, %v1004
      %v1006 = vsel %vm898, %v819, 0.0
      %v1007 = vadd.f32 %v1005, %v1006
      %v1008 = vsel %vm898, %v820, 0.0
      %v1009 = vadd.f32 %v1007, %v1008
      %v1010 = vsel %vm898, %v821, 0.0
      %v1011 = vadd.f32 %v1009, %v1010
      %v1012 = vsel %vm898, %v822, 0.0
      %v1013 = vadd.f32 %v1011, %v1012
      %v1014 = vsel %vm898, %v823, 0.0
      %v1015 = vadd.f32 %v1013, %v1014
      %v1016 = vsel %vm898, %v824, 0.0
      %v1017 = vadd.f32 %v1015, %v1016
      %v1018 = vsel %vm898, %v825, 0.0
      %v1019 = vadd.f32 %v1017, %v1018
      %v1020 = vsel %vm898, %v826, 0.0
      %v1021 = vadd.f32 %v1019, %v1020
      %v1022 = vsel %vm898, %v827, 0.0
      %v1023 = vadd.f32 %v1021, %v1022
      %v1024 = vsel %vm898, %v828, 0.0
      %v1025 = vadd.f32 %v1023, %v1024
      %v1026 = vsel %vm898, %v829, 0.0
      %v1027 = vadd.f32 %v1025, %v1026
      %v1028 = vsel %vm898, %v830, 0.0
      %v1029 = vadd.f32 %v1027, %v1028
      %v1030 = vsel %vm898, %v831, 0.0
      %v1031 = vadd.f32 %v1029, %v1030
      %v1032 = vsel %vm898, %v832, 0.0
      %v1033 = vadd.f32 %v1031, %v1032
      %v1034 = vsel %vm898, %v833, 0.0
      %v1035 = vadd.f32 %v1033, %v1034
      %v1036 = vsel %vm898, %v834, 0.0
      %v1037 = vadd.f32 %v1035, %v1036
      %v1038 = vsel %vm898, %v835, 0.0
      %v1039 = vadd.f32 %v1037, %v1038
      %v1040 = vsel %vm898, %v836, 0.0
      %v1041 = vadd.f32 %v1039, %v1040
      %v1042 = vsel %vm898, %v837, 0.0
      %v1043 = vadd.f32 %v1041, %v1042
      %v1044 = vsel %vm898, %v838, 0.0
      %v1045 = vadd.f32 %v1043, %v1044
      %v1046 = vsel %vm898, %v839, 0.0
      %v1047 = vadd.f32 %v1045, %v1046
      %v1048 = vsel %vm898, %v840, 0.0
      %v1049 = vadd.f32 %v1047, %v1048
      %v1050 = vsel %vm898, %v841, 0.0
      %v1051 = vadd.f32 %v1049, %v1050
      %v1052 = vsel %vm898, %v842, 0.0
      %v1053 = vadd.f32 %v1051, %v1052
      %v1054 = vsel %vm898, %v843, 0.0
      %v1055 = vadd.f32 %v1053, %v1054
      %v1056 = vsel %vm898, %v844, 0.0
      %v1057 = vadd.f32 %v1055, %v1056
      %v1058 = vsel %vm898, %v845, 0.0
      %v1059 = vadd.f32 %v1057, %v1058
      %v1060 = vsel %vm898, %v846, 0.0
      %v1061 = vadd.f32 %v1059, %v1060
      %v1062 = vsel %vm898, %v847, 0.0
      %v1063 = vadd.f32 %v1061, %v1062
      %v1064 = vsel %vm898, %v848, 0.0
      %v1065 = vadd.f32 %v1063, %v1064
      %v1066 = vsel %vm898, %v849, 0.0
      %v1067 = vadd.f32 %v1065, %v1066
      %v1068 = vsel %vm898, %v850, 0.0
      %v1069 = vadd.f32 %v1067, %v1068
      %v1070 = vsel %vm898, %v851, 0.0
      %v1071 = vadd.f32 %v1069, %v1070
      %v1072 = vsel %vm898, %v852, 0.0
      %v1073 = vadd.f32 %v1071, %v1072
      %v1074 = vsel %vm898, %v853, 0.0
      %v1075 = vadd.f32 %v1073, %v1074
      %v1076 = vsel %vm898, %v854, 0.0
      %v1077 = vadd.f32 %v1075, %v1076
      %v1078 = vsel %vm898, %v855, 0.0
      %v1079 = vadd.f32 %v1077, %v1078
      %v1080 = vsel %vm898, %v856, 0.0
      %v1081 = vadd.f32 %v1079, %v1080
      %v1082 = vsel %vm898, %v857, 0.0
      %v1083 = vadd.f32 %v1081, %v1082
      %v1084 = vsel %vm898, %v858, 0.0
      %v1085 = vadd.f32 %v1083, %v1084
      %v1086 = vsel %vm898, %v859, 0.0
      %v1087 = vadd.f32 %v1085, %v1086
      %v1088 = vsel %vm898, %v860, 0.0
      %v1089 = vadd.f32 %v1087, %v1088
      %v1090 = vsel %vm898, %v861, 0.0
      %v1091 = vadd.f32 %v1089, %v1090
      %v1092 = vsel %vm898, %v862, 0.0
      %v1093 = vadd.f32 %v1091, %v1092
      %v1094 = vsel %vm898, %v863, 0.0
      %v1095 = vadd.f32 %v1093, %v1094
      %v1096 = vsel %vm898, %v864, 0.0
      %v1097 = vadd.f32 %v1095, %v1096
      %v1098 = vsel %vm898, %v865, 0.0
      %v1099 = vadd.f32 %v1097, %v1098
      %v1100 = vsel %vm898, %v866, 0.0
      %v1101 = vadd.f32 %v1099, %v1100
      %v1102 = vsel %vm898, %v867, 0.0
      %v1103 = vadd.f32 %v1101, %v1102
      %v1104 = vsel %vm898, %v868, 0.0
      %v1105 = vadd.f32 %v1103, %v1104
      %v1106 = vsel %vm898, %v869, 0.0
      %v1107 = vadd.f32 %v1105, %v1106
      %v1108 = vsel %vm898, %v870, 0.0
      %v1109 = vadd.f32 %v1107, %v1108
      %v1110 = vsel %vm898, %v871, 0.0
      %v1111 = vadd.f32 %v1109, %v1110
      %v1112 = vsel %vm898, %v872, 0.0
      %v1113 = vadd.f32 %v1111, %v1112
      %v1114 = vsel %vm898, %v873, 0.0
      %v1115 = vadd.f32 %v1113, %v1114
      %v1116 = vsel %vm898, %v874, 0.0
      %v1117 = vadd.f32 %v1115, %v1116
      %v1118 = vsel %vm898, %v875, 0.0
      %v1119 = vadd.f32 %v1117, %v1118
      %v1120 = vsel %vm898, %v876, 0.0
      %v1121 = vadd.f32 %v1119, %v1120
      %v1122 = vsel %vm898, %v877, 0.0
      %v1123 = vadd.f32 %v1121, %v1122
      %v1124 = vsel %vm898, %v878, 0.0
      %v1125 = vadd.f32 %v1123, %v1124
      %v1126 = vsel %vm898, %v879, 0.0
      %v1127 = vadd.f32 %v1125, %v1126
      %v1128 = vsel %vm898, %v880, 0.0
      %v1129 = vadd.f32 %v1127, %v1128
      %v1130 = vsel %vm898, %v881, 0.0
      %v1131 = vadd.f32 %v1129, %v1130
      %v1132 = vsel %vm898, %v882, 0.0
      %v1133 = vadd.f32 %v1131, %v1132
      %v1134 = vsel %vm898, %v883, 0.0
      %v1135 = vadd.f32 %v1133, %v1134
      %v1136 = vsel %vm898, %v884, 0.0
      %v1137 = vadd.f32 %v1135, %v1136
      %v1138 = vsel %vm898, %v885, 0.0
      %v1139 = vadd.f32 %v1137, %v1138
      %v1140 = vsel %vm898, %v886, 0.0
      %v1141 = vadd.f32 %v1139, %v1140
      %v1142 = vsel %vm898, %v887, 0.0
      %v1143 = vadd.f32 %v1141, %v1142
      %v1144 = vsel %vm898, %v888, 0.0
      %v1145 = vadd.f32 %v1143, %v1144
      %v1146 = vsel %vm898, %v889, 0.0
      %v1147 = vadd.f32 %v1145, %v1146
      %1148 = vadd.xlane.f32.xlu0 %v1147
      %v1149 = vpop.xlane.xlu0 %1148
      %v1150 = vrot.slane %v1149, 4
      %v1151 = vadd.f32 %v1149, %v1150
      %v1152 = vrot.slane %v1151, 2
      %v1153 = vadd.f32 %v1151, %v1152
      %v1154 = vrot.slane %v1153, 1
      %v1155 = vadd.f32 %v1153, %v1154
      %s1156 = vtos %v1155
      %v1157 = vstv %s1156
      %v1158 = vadd.f32 %v897, %v1157
      %1159 = vst [vmem:[#allocation2] sm:$0xff] %v1158
    $region13: #{tpu_custom_call.1} parent=1 // pred_fallthru
      _
    // Predicated region
    $region14: #{tpu_custom_call.1} parent=1 // pred_check
      %p1160 = pneg %p892
    $region15: #{tpu_custom_call.1} parent=1 // pred_check_branch
      %1162 = sbr.rel (%p1160) target = $region17
    $region16: #{tpu_custom_call.1} parent=1 // pred_region
      %v1163 = vlaneseq
      %v1164 = vshrl.u32 %v1163, 7
      %v1165 = vadd.s32 %v1164, 8
      %v1166 = vadd.s32 %v1164, 16
      %v1167 = vadd.s32 %v1164, 24
      %v1168 = vadd.s32 %v1164, 32
      %v1169 = vadd.s32 %v1164, 40
      %v1170 = vadd.s32 %v1164, 48
      %v1171 = vadd.s32 %v1164, 56
      %v1172 = vadd.s32 %v1164, 64
      %v1173 = vadd.s32 %v1164, 72
      %v1174 = vadd.s32 %v1164, 80
      %v1175 = vadd.s32 %v1164, 88
      %v1176 = vadd.s32 %v1164, 96
      %v1177 = vadd.s32 %v1164, 104
      %v1178 = vadd.s32 %v1164, 112
      %v1179 = vadd.s32 %v1164, 120
      %v1180 = vadd.s32 %v1164, 128
      %v1181 = vadd.s32 %v1164, 136
      %v1182 = vadd.s32 %v1164, 144
      %v1183 = vadd.s32 %v1164, 152
      %v1184 = vadd.s32 %v1164, 160
      %v1185 = vadd.s32 %v1164, 168
      %v1186 = vadd.s32 %v1164, 176
      %v1187 = vadd.s32 %v1164, 184
      %v1188 = vadd.s32 %v1164, 192
      %v1189 = vadd.s32 %v1164, 200
      %v1190 = vadd.s32 %v1164, 208
      %v1191 = vadd.s32 %v1164, 216
      %v1192 = vadd.s32 %v1164, 224
      %v1193 = vadd.s32 %v1164, 232
      %v1194 = vadd.s32 %v1164, 240
      %v1195 = vadd.s32 %v1164, 248
      %v1196 = vadd.s32 %v1164, 256
      %v1197 = vadd.s32 %v1164, 264
      %v1198 = vadd.s32 %v1164, 272
      %v1199 = vadd.s32 %v1164, 280
      %v1200 = vadd.s32 %v1164, 288
      %v1201 = vadd.s32 %v1164, 296
      %v1202 = vadd.s32 %v1164, 304
      %v1203 = vadd.s32 %v1164, 312
      %v1204 = vadd.s32 %v1164, 320
      %v1205 = vadd.s32 %v1164, 328
      %v1206 = vadd.s32 %v1164, 336
      %v1207 = vadd.s32 %v1164, 344
      %v1208 = vadd.s32 %v1164, 352
      %v1209 = vadd.s32 %v1164, 360
      %v1210 = vadd.s32 %v1164, 368
      %v1211 = vadd.s32 %v1164, 376
      %v1212 = vadd.s32 %v1164, 384
      %v1213 = vadd.s32 %v1164, 392
      %v1214 = vadd.s32 %v1164, 400
      %v1215 = vadd.s32 %v1164, 408
      %v1216 = vadd.s32 %v1164, 416
      %v1217 = vadd.s32 %v1164, 424
      %v1218 = vadd.s32 %v1164, 432
      %v1219 = vadd.s32 %v1164, 440
      %v1220 = vadd.s32 %v1164, 448
      %v1221 = vadd.s32 %v1164, 456
      %v1222 = vadd.s32 %v1164, 464
      %v1223 = vadd.s32 %v1164, 472
      %v1224 = vadd.s32 %v1164, 480
      %v1225 = vadd.s32 %v1164, 488
      %v1226 = vadd.s32 %v1164, 496
      %v1227 = vadd.s32 %v1164, 504
      %v1228 = vadd.s32 %v1164, 512
      %v1229 = vadd.s32 %v1164, 520
      %v1230 = vadd.s32 %v1164, 528
      %v1231 = vadd.s32 %v1164, 536
      %v1232 = vadd.s32 %v1164, 544
      %v1233 = vadd.s32 %v1164, 552
      %v1234 = vadd.s32 %v1164, 560
      %v1235 = vadd.s32 %v1164, 568
      %v1236 = vadd.s32 %v1164, 576
      %v1237 = vadd.s32 %v1164, 584
      %v1238 = vadd.s32 %v1164, 592
      %v1239 = vadd.s32 %v1164, 600
      %v1240 = vadd.s32 %v1164, 608
      %v1241 = vadd.s32 %v1164, 616
      %v1242 = vadd.s32 %v1164, 624
      %v1243 = vadd.s32 %v1164, 632
      %v1244 = vadd.s32 %v1164, 640
      %v1245 = vadd.s32 %v1164, 648
      %v1246 = vadd.s32 %v1164, 656
      %v1247 = vadd.s32 %v1164, 664
      %v1248 = vadd.s32 %v1164, 672
      %v1249 = vadd.s32 %v1164, 680
      %v1250 = vadd.s32 %v1164, 688
      %v1251 = vadd.s32 %v1164, 696
      %v1252 = vadd.s32 %v1164, 704
      %v1253 = vadd.s32 %v1164, 712
      %v1254 = vadd.s32 %v1164, 720
      %v1255 = vadd.s32 %v1164, 728
      %v1256 = vadd.s32 %v1164, 736
      %v1257 = vadd.s32 %v1164, 744
      %v1258 = vadd.s32 %v1164, 752
      %v1259 = vadd.s32 %v1164, 760
      %v1260 = vadd.s32 %v1164, 768
      %v1261 = vadd.s32 %v1164, 776
      %v1262 = vadd.s32 %v1164, 784
      %v1263 = vadd.s32 %v1164, 792
      %v1264 = vadd.s32 %v1164, 800
      %v1265 = vadd.s32 %v1164, 808
      %v1266 = vadd.s32 %v1164, 816
      %v1267 = vadd.s32 %v1164, 824
      %v1268 = vadd.s32 %v1164, 832
      %v1269 = vadd.s32 %v1164, 840
      %v1270 = vadd.s32 %v1164, 848
      %v1271 = vadd.s32 %v1164, 856
      %v1272 = vadd.s32 %v1164, 864
      %v1273 = vadd.s32 %v1164, 872
      %v1274 = vadd.s32 %v1164, 880
      %v1275 = vadd.s32 %v1164, 888
      %v1276 = vadd.s32 %v1164, 896
      %v1277 = vadd.s32 %v1164, 904
      %v1278 = vadd.s32 %v1164, 912
      %v1279 = vadd.s32 %v1164, 920
      %v1280 = vadd.s32 %v1164, 928
      %v1281 = vadd.s32 %v1164, 936
      %v1282 = vadd.s32 %v1164, 944
      %v1283 = vadd.s32 %v1164, 952
      %v1284 = vadd.s32 %v1164, 960
      %v1285 = vadd.s32 %v1164, 968
      %v1286 = vadd.s32 %v1164, 976
      %v1287 = vadd.s32 %v1164, 984
      %v1288 = vadd.s32 %v1164, 992
      %v1289 = vstv %s890
      %v1290 = vadd.s32 %v1289, %v1164
      %v1291 = vadd.s32 %v1289, %v1165
      %v1292 = vadd.s32 %v1289, %v1166
      %v1293 = vadd.s32 %v1289, %v1167
      %v1294 = vadd.s32 %v1289, %v1168
      %v1295 = vadd.s32 %v1289, %v1169
      %v1296 = vadd.s32 %v1289, %v1170
      %v1297 = vadd.s32 %v1289, %v1171
      %v1298 = vadd.s32 %v1289, %v1172
      %v1299 = vadd.s32 %v1289, %v1173
      %v1300 = vadd.s32 %v1289, %v1174
      %v1301 = vadd.s32 %v1289, %v1175
      %v1302 = vadd.s32 %v1289, %v1176
      %v1303 = vadd.s32 %v1289, %v1177
      %v1304 = vadd.s32 %v1289, %v1178
      %v1305 = vadd.s32 %v1289, %v1179
      %v1306 = vadd.s32 %v1289, %v1180
      %v1307 = vadd.s32 %v1289, %v1181
      %v1308 = vadd.s32 %v1289, %v1182
      %v1309 = vadd.s32 %v1289, %v1183
      %v1310 = vadd.s32 %v1289, %v1184
      %v1311 = vadd.s32 %v1289, %v1185
      %v1312 = vadd.s32 %v1289, %v1186
      %v1313 = vadd.s32 %v1289, %v1187
      %v1314 = vadd.s32 %v1289, %v1188
      %v1315 = vadd.s32 %v1289, %v1189
      %v1316 = vadd.s32 %v1289, %v1190
      %v1317 = vadd.s32 %v1289, %v1191
      %v1318 = vadd.s32 %v1289, %v1192
      %v1319 = vadd.s32 %v1289, %v1193
      %v1320 = vadd.s32 %v1289, %v1194
      %v1321 = vadd.s32 %v1289, %v1195
      %v1322 = vadd.s32 %v1289, %v1196
      %v1323 = vadd.s32 %v1289, %v1197
      %v1324 = vadd.s32 %v1289, %v1198
      %v1325 = vadd.s32 %v1289, %v1199
      %v1326 = vadd.s32 %v1289, %v1200
      %v1327 = vadd.s32 %v1289, %v1201
      %v1328 = vadd.s32 %v1289, %v1202
      %v1329 = vadd.s32 %v1289, %v1203
      %v1330 = vadd.s32 %v1289, %v1204
      %v1331 = vadd.s32 %v1289, %v1205
      %v1332 = vadd.s32 %v1289, %v1206
      %v1333 = vadd.s32 %v1289, %v1207
      %v1334 = vadd.s32 %v1289, %v1208
      %v1335 = vadd.s32 %v1289, %v1209
      %v1336 = vadd.s32 %v1289, %v1210
      %v1337 = vadd.s32 %v1289, %v1211
      %v1338 = vadd.s32 %v1289, %v1212
      %v1339 = vadd.s32 %v1289, %v1213
      %v1340 = vadd.s32 %v1289, %v1214
      %v1341 = vadd.s32 %v1289, %v1215
      %v1342 = vadd.s32 %v1289, %v1216
      %v1343 = vadd.s32 %v1289, %v1217
      %v1344 = vadd.s32 %v1289, %v1218
      %v1345 = vadd.s32 %v1289, %v1219
      %v1346 = vadd.s32 %v1289, %v1220
      %v1347 = vadd.s32 %v1289, %v1221
      %v1348 = vadd.s32 %v1289, %v1222
      %v1349 = vadd.s32 %v1289, %v1223
      %v1350 = vadd.s32 %v1289, %v1224
      %v1351 = vadd.s32 %v1289, %v1225
      %v1352 = vadd.s32 %v1289, %v1226
      %v1353 = vadd.s32 %v1289, %v1227
      %v1354 = vadd.s32 %v1289, %v1228
      %v1355 = vadd.s32 %v1289, %v1229
      %v1356 = vadd.s32 %v1289, %v1230
      %v1357 = vadd.s32 %v1289, %v1231
      %v1358 = vadd.s32 %v1289, %v1232
      %v1359 = vadd.s32 %v1289, %v1233
      %v1360 = vadd.s32 %v1289, %v1234
      %v1361 = vadd.s32 %v1289, %v1235
      %v1362 = vadd.s32 %v1289, %v1236
      %v1363 = vadd.s32 %v1289, %v1237
      %v1364 = vadd.s32 %v1289, %v1238
      %v1365 = vadd.s32 %v1289, %v1239
      %v1366 = vadd.s32 %v1289, %v1240
      %v1367 = vadd.s32 %v1289, %v1241
      %v1368 = vadd.s32 %v1289, %v1242
      %v1369 = vadd.s32 %v1289, %v1243
      %v1370 = vadd.s32 %v1289, %v1244
      %v1371 = vadd.s32 %v1289, %v1245
      %v1372 = vadd.s32 %v1289, %v1246
      %v1373 = vadd.s32 %v1289, %v1247
      %v1374 = vadd.s32 %v1289, %v1248
      %v1375 = vadd.s32 %v1289, %v1249
      %v1376 = vadd.s32 %v1289, %v1250
      %v1377 = vadd.s32 %v1289, %v1251
      %v1378 = vadd.s32 %v1289, %v1252
      %v1379 = vadd.s32 %v1289, %v1253
      %v1380 = vadd.s32 %v1289, %v1254
      %v1381 = vadd.s32 %v1289, %v1255
      %v1382 = vadd.s32 %v1289, %v1256
      %v1383 = vadd.s32 %v1289, %v1257
      %v1384 = vadd.s32 %v1289, %v1258
      %v1385 = vadd.s32 %v1289, %v1259
      %v1386 = vadd.s32 %v1289, %v1260
      %v1387 = vadd.s32 %v1289, %v1261
      %v1388 = vadd.s32 %v1289, %v1262
      %v1389 = vadd.s32 %v1289, %v1263
      %v1390 = vadd.s32 %v1289, %v1264
      %v1391 = vadd.s32 %v1289, %v1265
      %v1392 = vadd.s32 %v1289, %v1266
      %v1393 = vadd.s32 %v1289, %v1267
      %v1394 = vadd.s32 %v1289, %v1268
      %v1395 = vadd.s32 %v1289, %v1269
      %v1396 = vadd.s32 %v1289, %v1270
      %v1397 = vadd.s32 %v1289, %v1271
      %v1398 = vadd.s32 %v1289, %v1272
      %v1399 = vadd.s32 %v1289, %v1273
      %v1400 = vadd.s32 %v1289, %v1274
      %v1401 = vadd.s32 %v1289, %v1275
      %v1402 = vadd.s32 %v1289, %v1276
      %v1403 = vadd.s32 %v1289, %v1277
      %v1404 = vadd.s32 %v1289, %v1278
      %v1405 = vadd.s32 %v1289, %v1279
      %v1406 = vadd.s32 %v1289, %v1280
      %v1407 = vadd.s32 %v1289, %v1281
      %v1408 = vadd.s32 %v1289, %v1282
      %v1409 = vadd.s32 %v1289, %v1283
      %v1410 = vadd.s32 %v1289, %v1284
      %v1411 = vadd.s32 %v1289, %v1285
      %v1412 = vadd.s32 %v1289, %v1286
      %v1413 = vadd.s32 %v1289, %v1287
      %v1414 = vadd.s32 %v1289, %v1288
      %v1415 = vld [vmem:[#allocation2] sm:$0xff]
      %vm1416 = vcmp.lt.s32.totalorder %v1290, 1000
      %vm1417 = vcmp.lt.s32.totalorder %v1291, 1000
      %vm1418 = vcmp.lt.s32.totalorder %v1292, 1000
      %vm1419 = vcmp.lt.s32.totalorder %v1293, 1000
      %vm1420 = vcmp.lt.s32.totalorder %v1294, 1000
      %vm1421 = vcmp.lt.s32.totalorder %v1295, 1000
      %vm1422 = vcmp.lt.s32.totalorder %v1296, 1000
      %vm1423 = vcmp.lt.s32.totalorder %v1297, 1000
      %vm1424 = vcmp.lt.s32.totalorder %v1298, 1000
      %vm1425 = vcmp.lt.s32.totalorder %v1299, 1000
      %vm1426 = vcmp.lt.s32.totalorder %v1300, 1000
      %vm1427 = vcmp.lt.s32.totalorder %v1301, 1000
      %vm1428 = vcmp.lt.s32.totalorder %v1302, 1000
      %vm1429 = vcmp.lt.s32.totalorder %v1303, 1000
      %vm1430 = vcmp.lt.s32.totalorder %v1304, 1000
      %vm1431 = vcmp.lt.s32.totalorder %v1305, 1000
      %vm1432 = vcmp.lt.s32.totalorder %v1306, 1000
      %vm1433 = vcmp.lt.s32.totalorder %v1307, 1000
      %vm1434 = vcmp.lt.s32.totalorder %v1308, 1000
      %vm1435 = vcmp.lt.s32.totalorder %v1309, 1000
      %vm1436 = vcmp.lt.s32.totalorder %v1310, 1000
      %vm1437 = vcmp.lt.s32.totalorder %v1311, 1000
      %vm1438 = vcmp.lt.s32.totalorder %v1312, 1000
      %vm1439 = vcmp.lt.s32.totalorder %v1313, 1000
      %vm1440 = vcmp.lt.s32.totalorder %v1314, 1000
      %vm1441 = vcmp.lt.s32.totalorder %v1315, 1000
      %vm1442 = vcmp.lt.s32.totalorder %v1316, 1000
      %vm1443 = vcmp.lt.s32.totalorder %v1317, 1000
      %vm1444 = vcmp.lt.s32.totalorder %v1318, 1000
      %vm1445 = vcmp.lt.s32.totalorder %v1319, 1000
      %vm1446 = vcmp.lt.s32.totalorder %v1320, 1000
      %vm1447 = vcmp.lt.s32.totalorder %v1321, 1000
      %vm1448 = vcmp.lt.s32.totalorder %v1322, 1000
      %vm1449 = vcmp.lt.s32.totalorder %v1323, 1000
      %vm1450 = vcmp.lt.s32.totalorder %v1324, 1000
      %vm1451 = vcmp.lt.s32.totalorder %v1325, 1000
      %vm1452 = vcmp.lt.s32.totalorder %v1326, 1000
      %vm1453 = vcmp.lt.s32.totalorder %v1327, 1000
      %vm1454 = vcmp.lt.s32.totalorder %v1328, 1000
      %vm1455 = vcmp.lt.s32.totalorder %v1329, 1000
      %vm1456 = vcmp.lt.s32.totalorder %v1330, 1000
      %vm1457 = vcmp.lt.s32.totalorder %v1331, 1000
      %vm1458 = vcmp.lt.s32.totalorder %v1332, 1000
      %vm1459 = vcmp.lt.s32.totalorder %v1333, 1000
      %vm1460 = vcmp.lt.s32.totalorder %v1334, 1000
      %vm1461 = vcmp.lt.s32.totalorder %v1335, 1000
      %vm1462 = vcmp.lt.s32.totalorder %v1336, 1000
      %vm1463 = vcmp.lt.s32.totalorder %v1337, 1000
      %vm1464 = vcmp.lt.s32.totalorder %v1338, 1000
      %vm1465 = vcmp.lt.s32.totalorder %v1339, 1000
      %vm1466 = vcmp.lt.s32.totalorder %v1340, 1000
      %vm1467 = vcmp.lt.s32.totalorder %v1341, 1000
      %vm1468 = vcmp.lt.s32.totalorder %v1342, 1000
      %vm1469 = vcmp.lt.s32.totalorder %v1343, 1000
      %vm1470 = vcmp.lt.s32.totalorder %v1344, 1000
      %vm1471 = vcmp.lt.s32.totalorder %v1345, 1000
      %vm1472 = vcmp.lt.s32.totalorder %v1346, 1000
      %vm1473 = vcmp.lt.s32.totalorder %v1347, 1000
      %vm1474 = vcmp.lt.s32.totalorder %v1348, 1000
      %vm1475 = vcmp.lt.s32.totalorder %v1349, 1000
      %vm1476 = vcmp.lt.s32.totalorder %v1350, 1000
      %vm1477 = vcmp.lt.s32.totalorder %v1351, 1000
      %vm1478 = vcmp.lt.s32.totalorder %v1352, 1000
      %vm1479 = vcmp.lt.s32.totalorder %v1353, 1000
      %vm1480 = vcmp.lt.s32.totalorder %v1354, 1000
      %vm1481 = vcmp.lt.s32.totalorder %v1355, 1000
      %vm1482 = vcmp.lt.s32.totalorder %v1356, 1000
      %vm1483 = vcmp.lt.s32.totalorder %v1357, 1000
      %vm1484 = vcmp.lt.s32.totalorder %v1358, 1000
      %vm1485 = vcmp.lt.s32.totalorder %v1359, 1000
      %vm1486 = vcmp.lt.s32.totalorder %v1360, 1000
      %vm1487 = vcmp.lt.s32.totalorder %v1361, 1000
      %vm1488 = vcmp.lt.s32.totalorder %v1362, 1000
      %vm1489 = vcmp.lt.s32.totalorder %v1363, 1000
      %vm1490 = vcmp.lt.s32.totalorder %v1364, 1000
      %vm1491 = vcmp.lt.s32.totalorder %v1365, 1000
      %vm1492 = vcmp.lt.s32.totalorder %v1366, 1000
      %vm1493 = vcmp.lt.s32.totalorder %v1367, 1000
      %vm1494 = vcmp.lt.s32.totalorder %v1368, 1000
      %vm1495 = vcmp.lt.s32.totalorder %v1369, 1000
      %vm1496 = vcmp.lt.s32.totalorder %v1370, 1000
      %vm1497 = vcmp.lt.s32.totalorder %v1371, 1000
      %vm1498 = vcmp.lt.s32.totalorder %v1372, 1000
      %vm1499 = vcmp.lt.s32.totalorder %v1373, 1000
      %vm1500 = vcmp.lt.s32.totalorder %v1374, 1000
      %vm1501 = vcmp.lt.s32.totalorder %v1375, 1000
      %vm1502 = vcmp.lt.s32.totalorder %v1376, 1000
      %vm1503 = vcmp.lt.s32.totalorder %v1377, 1000
      %vm1504 = vcmp.lt.s32.totalorder %v1378, 1000
      %vm1505 = vcmp.lt.s32.totalorder %v1379, 1000
      %vm1506 = vcmp.lt.s32.totalorder %v1380, 1000
      %vm1507 = vcmp.lt.s32.totalorder %v1381, 1000
      %vm1508 = vcmp.lt.s32.totalorder %v1382, 1000
      %vm1509 = vcmp.lt.s32.totalorder %v1383, 1000
      %vm1510 = vcmp.lt.s32.totalorder %v1384, 1000
      %vm1511 = vcmp.lt.s32.totalorder %v1385, 1000
      %vm1512 = vcmp.lt.s32.totalorder %v1386, 1000
      %vm1513 = vcmp.lt.s32.totalorder %v1387, 1000
      %vm1514 = vcmp.lt.s32.totalorder %v1388, 1000
      %vm1515 = vcmp.lt.s32.totalorder %v1389, 1000
      %vm1516 = vcmp.lt.s32.totalorder %v1390, 1000
      %vm1517 = vcmp.lt.s32.totalorder %v1391, 1000
      %vm1518 = vcmp.lt.s32.totalorder %v1392, 1000
      %vm1519 = vcmp.lt.s32.totalorder %v1393, 1000
      %vm1520 = vcmp.lt.s32.totalorder %v1394, 1000
      %vm1521 = vcmp.lt.s32.totalorder %v1395, 1000
      %vm1522 = vcmp.lt.s32.totalorder %v1396, 1000
      %vm1523 = vcmp.lt.s32.totalorder %v1397, 1000
      %vm1524 = vcmp.lt.s32.totalorder %v1398, 1000
      %vm1525 = vcmp.lt.s32.totalorder %v1399, 1000
      %vm1526 = vcmp.lt.s32.totalorder %v1400, 1000
      %vm1527 = vcmp.lt.s32.totalorder %v1401, 1000
      %vm1528 = vcmp.lt.s32.totalorder %v1402, 1000
      %vm1529 = vcmp.lt.s32.totalorder %v1403, 1000
      %vm1530 = vcmp.lt.s32.totalorder %v1404, 1000
      %vm1531 = vcmp.lt.s32.totalorder %v1405, 1000
      %vm1532 = vcmp.lt.s32.totalorder %v1406, 1000
      %vm1533 = vcmp.lt.s32.totalorder %v1407, 1000
      %vm1534 = vcmp.lt.s32.totalorder %v1408, 1000
      %vm1535 = vcmp.lt.s32.totalorder %v1409, 1000
      %vm1536 = vcmp.lt.s32.totalorder %v1410, 1000
      %vm1537 = vcmp.lt.s32.totalorder %v1411, 1000
      %vm1538 = vcmp.lt.s32.totalorder %v1412, 1000
      %vm1539 = vcmp.lt.s32.totalorder %v1413, 1000
      %vm1540 = vcmp.lt.s32.totalorder %v1414, 1000
      %v1541 = vsel %vm1416, %v765, 0.0
      %v1542 = vsel %vm1417, %v766, 0.0
      %v1543 = vsel %vm1418, %v767, 0.0
      %v1544 = vsel %vm1419, %v768, 0.0
      %v1545 = vsel %vm1420, %v769, 0.0
      %v1546 = vsel %vm1421, %v770, 0.0
      %v1547 = vsel %vm1422, %v771, 0.0
      %v1548 = vsel %vm1423, %v772, 0.0
      %v1549 = vsel %vm1424, %v773, 0.0
      %v1550 = vsel %vm1425, %v774, 0.0
      %v1551 = vsel %vm1426, %v775, 0.0
      %v1552 = vsel %vm1427, %v776, 0.0
      %v1553 = vsel %vm1428, %v777, 0.0
      %v1554 = vsel %vm1429, %v778, 0.0
      %v1555 = vsel %vm1430, %v779, 0.0
      %v1556 = vsel %vm1431, %v780, 0.0
      %v1557 = vsel %vm1432, %v781, 0.0
      %v1558 = vsel %vm1433, %v782, 0.0
      %v1559 = vsel %vm1434, %v783, 0.0
      %v1560 = vsel %vm1435, %v784, 0.0
      %v1561 = vsel %vm1436, %v785, 0.0
      %v1562 = vsel %vm1437, %v786, 0.0
      %v1563 = vsel %vm1438, %v787, 0.0
      %v1564 = vsel %vm1439, %v788, 0.0
      %v1565 = vsel %vm1440, %v789, 0.0
      %v1566 = vsel %vm1441, %v790, 0.0
      %v1567 = vsel %vm1442, %v791, 0.0
      %v1568 = vsel %vm1443, %v792, 0.0
      %v1569 = vsel %vm1444, %v793, 0.0
      %v1570 = vsel %vm1445, %v794, 0.0
      %v1571 = vsel %vm1446, %v795, 0.0
      %v1572 = vsel %vm1447, %v796, 0.0
      %v1573 = vsel %vm1448, %v797, 0.0
      %v1574 = vsel %vm1449, %v798, 0.0
      %v1575 = vsel %vm1450, %v799, 0.0
      %v1576 = vsel %vm1451, %v800, 0.0
      %v1577 = vsel %vm1452, %v801, 0.0
      %v1578 = vsel %vm1453, %v802, 0.0
      %v1579 = vsel %vm1454, %v803, 0.0
      %v1580 = vsel %vm1455, %v804, 0.0
      %v1581 = vsel %vm1456, %v805, 0.0
      %v1582 = vsel %vm1457, %v806, 0.0
      %v1583 = vsel %vm1458, %v807, 0.0
      %v1584 = vsel %vm1459, %v808, 0.0
      %v1585 = vsel %vm1460, %v809, 0.0
      %v1586 = vsel %vm1461, %v810, 0.0
      %v1587 = vsel %vm1462, %v811, 0.0
      %v1588 = vsel %vm1463, %v812, 0.0
      %v1589 = vsel %vm1464, %v813, 0.0
      %v1590 = vsel %vm1465, %v814, 0.0
      %v1591 = vsel %vm1466, %v815, 0.0
      %v1592 = vsel %vm1467, %v816, 0.0
      %v1593 = vsel %vm1468, %v817, 0.0
      %v1594 = vsel %vm1469, %v818, 0.0
      %v1595 = vsel %vm1470, %v819, 0.0
      %v1596 = vsel %vm1471, %v820, 0.0
      %v1597 = vsel %vm1472, %v821, 0.0
      %v1598 = vsel %vm1473, %v822, 0.0
      %v1599 = vsel %vm1474, %v823, 0.0
      %v1600 = vsel %vm1475, %v824, 0.0
      %v1601 = vsel %vm1476, %v825, 0.0
      %v1602 = vsel %vm1477, %v826, 0.0
      %v1603 = vsel %vm1478, %v827, 0.0
      %v1604 = vsel %vm1479, %v828, 0.0
      %v1605 = vsel %vm1480, %v829, 0.0
      %v1606 = vsel %vm1481, %v830, 0.0
      %v1607 = vsel %vm1482, %v831, 0.0
      %v1608 = vsel %vm1483, %v832, 0.0
      %v1609 = vsel %vm1484, %v833, 0.0
      %v1610 = vsel %vm1485, %v834, 0.0
      %v1611 = vsel %vm1486, %v835, 0.0
      %v1612 = vsel %vm1487, %v836, 0.0
      %v1613 = vsel %vm1488, %v837, 0.0
      %v1614 = vsel %vm1489, %v838, 0.0
      %v1615 = vsel %vm1490, %v839, 0.0
      %v1616 = vsel %vm1491, %v840, 0.0
      %v1617 = vsel %vm1492, %v841, 0.0
      %v1618 = vsel %vm1493, %v842, 0.0
      %v1619 = vsel %vm1494, %v843, 0.0
      %v1620 = vsel %vm1495, %v844, 0.0
      %v1621 = vsel %vm1496, %v845, 0.0
      %v1622 = vsel %vm1497, %v846, 0.0
      %v1623 = vsel %vm1498, %v847, 0.0
      %v1624 = vsel %vm1499, %v848, 0.0
      %v1625 = vsel %vm1500, %v849, 0.0
      %v1626 = vsel %vm1501, %v850, 0.0
      %v1627 = vsel %vm1502, %v851, 0.0
      %v1628 = vsel %vm1503, %v852, 0.0
      %v1629 = vsel %vm1504, %v853, 0.0
      %v1630 = vsel %vm1505, %v854, 0.0
      %v1631 = vsel %vm1506, %v855, 0.0
      %v1632 = vsel %vm1507, %v856, 0.0
      %v1633 = vsel %vm1508, %v857, 0.0
      %v1634 = vsel %vm1509, %v858, 0.0
      %v1635 = vsel %vm1510, %v859, 0.0
      %v1636 = vsel %vm1511, %v860, 0.0
      %v1637 = vsel %vm1512, %v861, 0.0
      %v1638 = vsel %vm1513, %v862, 0.0
      %v1639 = vsel %vm1514, %v863, 0.0
      %v1640 = vsel %vm1515, %v864, 0.0
      %v1641 = vsel %vm1516, %v865, 0.0
      %v1642 = vsel %vm1517, %v866, 0.0
      %v1643 = vsel %vm1518, %v867, 0.0
      %v1644 = vsel %vm1519, %v868, 0.0
      %v1645 = vsel %vm1520, %v869, 0.0
      %v1646 = vsel %vm1521, %v870, 0.0
      %v1647 = vsel %vm1522, %v871, 0.0
      %v1648 = vsel %vm1523, %v872, 0.0
      %v1649 = vsel %vm1524, %v873, 0.0
      %v1650 = vsel %vm1525, %v874, 0.0
      %v1651 = vsel %vm1526, %v875, 0.0
      %v1652 = vsel %vm1527, %v876, 0.0
      %v1653 = vsel %vm1528, %v877, 0.0
      %v1654 = vsel %vm1529, %v878, 0.0
      %v1655 = vsel %vm1530, %v879, 0.0
      %v1656 = vsel %vm1531, %v880, 0.0
      %v1657 = vsel %vm1532, %v881, 0.0
      %v1658 = vsel %vm1533, %v882, 0.0
      %v1659 = vsel %vm1534, %v883, 0.0
      %v1660 = vsel %vm1535, %v884, 0.0
      %v1661 = vsel %vm1536, %v885, 0.0
      %v1662 = vsel %vm1537, %v886, 0.0
      %v1663 = vsel %vm1538, %v887, 0.0
      %v1664 = vsel %vm1539, %v888, 0.0
      %v1665 = vsel %vm1540, %v889, 0.0
      %vm1666 = vcmask 7168
      %v1667 = vsel %vm1666, %v1541, 0.0
      %v1668 = vsel %vm1666, %v1542, 0.0
      %v1669 = vadd.f32 %v1667, %v1668
      %v1670 = vsel %vm1666, %v1543, 0.0
      %v1671 = vadd.f32 %v1669, %v1670
      %v1672 = vsel %vm1666, %v1544, 0.0
      %v1673 = vadd.f32 %v1671, %v1672
      %v1674 = vsel %vm1666, %v1545, 0.0
      %v1675 = vadd.f32 %v1673, %v1674
      %v1676 = vsel %vm1666, %v1546, 0.0
      %v1677 = vadd.f32 %v1675, %v1676
      %v1678 = vsel %vm1666, %v1547, 0.0
      %v1679 = vadd.f32 %v1677, %v1678
      %v1680 = vsel %vm1666, %v1548, 0.0
      %v1681 = vadd.f32 %v1679, %v1680
      %v1682 = vsel %vm1666, %v1549, 0.0
      %v1683 = vadd.f32 %v1681, %v1682
      %v1684 = vsel %vm1666, %v1550, 0.0
      %v1685 = vadd.f32 %v1683, %v1684
      %v1686 = vsel %vm1666, %v1551, 0.0
      %v1687 = vadd.f32 %v1685, %v1686
      %v1688 = vsel %vm1666, %v1552, 0.0
      %v1689 = vadd.f32 %v1687, %v1688
      %v1690 = vsel %vm1666, %v1553, 0.0
      %v1691 = vadd.f32 %v1689, %v1690
      %v1692 = vsel %vm1666, %v1554, 0.0
      %v1693 = vadd.f32 %v1691, %v1692
      %v1694 = vsel %vm1666, %v1555, 0.0
      %v1695 = vadd.f32 %v1693, %v1694
      %v1696 = vsel %vm1666, %v1556, 0.0
      %v1697 = vadd.f32 %v1695, %v1696
      %v1698 = vsel %vm1666, %v1557, 0.0
      %v1699 = vadd.f32 %v1697, %v1698
      %v1700 = vsel %vm1666, %v1558, 0.0
      %v1701 = vadd.f32 %v1699, %v1700
      %v1702 = vsel %vm1666, %v1559, 0.0
      %v1703 = vadd.f32 %v1701, %v1702
      %v1704 = vsel %vm1666, %v1560, 0.0
      %v1705 = vadd.f32 %v1703, %v1704
      %v1706 = vsel %vm1666, %v1561, 0.0
      %v1707 = vadd.f32 %v1705, %v1706
      %v1708 = vsel %vm1666, %v1562, 0.0
      %v1709 = vadd.f32 %v1707, %v1708
      %v1710 = vsel %vm1666, %v1563, 0.0
      %v1711 = vadd.f32 %v1709, %v1710
      %v1712 = vsel %vm1666, %v1564, 0.0
      %v1713 = vadd.f32 %v1711, %v1712
      %v1714 = vsel %vm1666, %v1565, 0.0
      %v1715 = vadd.f32 %v1713, %v1714
      %v1716 = vsel %vm1666, %v1566, 0.0
      %v1717 = vadd.f32 %v1715, %v1716
      %v1718 = vsel %vm1666, %v1567, 0.0
      %v1719 = vadd.f32 %v1717, %v1718
      %v1720 = vsel %vm1666, %v1568, 0.0
      %v1721 = vadd.f32 %v1719, %v1720
      %v1722 = vsel %vm1666, %v1569, 0.0
      %v1723 = vadd.f32 %v1721, %v1722
      %v1724 = vsel %vm1666, %v1570, 0.0
      %v1725 = vadd.f32 %v1723, %v1724
      %v1726 = vsel %vm1666, %v1571, 0.0
      %v1727 = vadd.f32 %v1725, %v1726
      %v1728 = vsel %vm1666, %v1572, 0.0
      %v1729 = vadd.f32 %v1727, %v1728
      %v1730 = vsel %vm1666, %v1573, 0.0
      %v1731 = vadd.f32 %v1729, %v1730
      %v1732 = vsel %vm1666, %v1574, 0.0
      %v1733 = vadd.f32 %v1731, %v1732
      %v1734 = vsel %vm1666, %v1575, 0.0
      %v1735 = vadd.f32 %v1733, %v1734
      %v1736 = vsel %vm1666, %v1576, 0.0
      %v1737 = vadd.f32 %v1735, %v1736
      %v1738 = vsel %vm1666, %v1577, 0.0
      %v1739 = vadd.f32 %v1737, %v1738
      %v1740 = vsel %vm1666, %v1578, 0.0
      %v1741 = vadd.f32 %v1739, %v1740
      %v1742 = vsel %vm1666, %v1579, 0.0
      %v1743 = vadd.f32 %v1741, %v1742
      %v1744 = vsel %vm1666, %v1580, 0.0
      %v1745 = vadd.f32 %v1743, %v1744
      %v1746 = vsel %vm1666, %v1581, 0.0
      %v1747 = vadd.f32 %v1745, %v1746
      %v1748 = vsel %vm1666, %v1582, 0.0
      %v1749 = vadd.f32 %v1747, %v1748
      %v1750 = vsel %vm1666, %v1583, 0.0
      %v1751 = vadd.f32 %v1749, %v1750
      %v1752 = vsel %vm1666, %v1584, 0.0
      %v1753 = vadd.f32 %v1751, %v1752
      %v1754 = vsel %vm1666, %v1585, 0.0
      %v1755 = vadd.f32 %v1753, %v1754
      %v1756 = vsel %vm1666, %v1586, 0.0
      %v1757 = vadd.f32 %v1755, %v1756
      %v1758 = vsel %vm1666, %v1587, 0.0
      %v1759 = vadd.f32 %v1757, %v1758
      %v1760 = vsel %vm1666, %v1588, 0.0
      %v1761 = vadd.f32 %v1759, %v1760
      %v1762 = vsel %vm1666, %v1589, 0.0
      %v1763 = vadd.f32 %v1761, %v1762
      %v1764 = vsel %vm1666, %v1590, 0.0
      %v1765 = vadd.f32 %v1763, %v1764
      %v1766 = vsel %vm1666, %v1591, 0.0
      %v1767 = vadd.f32 %v1765, %v1766
      %v1768 = vsel %vm1666, %v1592, 0.0
      %v1769 = vadd.f32 %v1767, %v1768
      %v1770 = vsel %vm1666, %v1593, 0.0
      %v1771 = vadd.f32 %v1769, %v1770
      %v1772 = vsel %vm1666, %v1594, 0.0
      %v1773 = vadd.f32 %v1771, %v1772
      %v1774 = vsel %vm1666, %v1595, 0.0
      %v1775 = vadd.f32 %v1773, %v1774
      %v1776 = vsel %vm1666, %v1596, 0.0
      %v1777 = vadd.f32 %v1775, %v1776
      %v1778 = vsel %vm1666, %v1597, 0.0
      %v1779 = vadd.f32 %v1777, %v1778
      %v1780 = vsel %vm1666, %v1598, 0.0
      %v1781 = vadd.f32 %v1779, %v1780
      %v1782 = vsel %vm1666, %v1599, 0.0
      %v1783 = vadd.f32 %v1781, %v1782
      %v1784 = vsel %vm1666, %v1600, 0.0
      %v1785 = vadd.f32 %v1783, %v1784
      %v1786 = vsel %vm1666, %v1601, 0.0
      %v1787 = vadd.f32 %v1785, %v1786
      %v1788 = vsel %vm1666, %v1602, 0.0
      %v1789 = vadd.f32 %v1787, %v1788
      %v1790 = vsel %vm1666, %v1603, 0.0
      %v1791 = vadd.f32 %v1789, %v1790
      %v1792 = vsel %vm1666, %v1604, 0.0
      %v1793 = vadd.f32 %v1791, %v1792
      %v1794 = vsel %vm1666, %v1605, 0.0
      %v1795 = vadd.f32 %v1793, %v1794
      %v1796 = vsel %vm1666, %v1606, 0.0
      %v1797 = vadd.f32 %v1795, %v1796
      %v1798 = vsel %vm1666, %v1607, 0.0
      %v1799 = vadd.f32 %v1797, %v1798
      %v1800 = vsel %vm1666, %v1608, 0.0
      %v1801 = vadd.f32 %v1799, %v1800
      %v1802 = vsel %vm1666, %v1609, 0.0
      %v1803 = vadd.f32 %v1801, %v1802
      %v1804 = vsel %vm1666, %v1610, 0.0
      %v1805 = vadd.f32 %v1803, %v1804
      %v1806 = vsel %vm1666, %v1611, 0.0
      %v1807 = vadd.f32 %v1805, %v1806
      %v1808 = vsel %vm1666, %v1612, 0.0
      %v1809 = vadd.f32 %v1807, %v1808
      %v1810 = vsel %vm1666, %v1613, 0.0
      %v1811 = vadd.f32 %v1809, %v1810
      %v1812 = vsel %vm1666, %v1614, 0.0
      %v1813 = vadd.f32 %v1811, %v1812
      %v1814 = vsel %vm1666, %v1615, 0.0
      %v1815 = vadd.f32 %v1813, %v1814
      %v1816 = vsel %vm1666, %v1616, 0.0
      %v1817 = vadd.f32 %v1815, %v1816
      %v1818 = vsel %vm1666, %v1617, 0.0
      %v1819 = vadd.f32 %v1817, %v1818
      %v1820 = vsel %vm1666, %v1618, 0.0
      %v1821 = vadd.f32 %v1819, %v1820
      %v1822 = vsel %vm1666, %v1619, 0.0
      %v1823 = vadd.f32 %v1821, %v1822
      %v1824 = vsel %vm1666, %v1620, 0.0
      %v1825 = vadd.f32 %v1823, %v1824
      %v1826 = vsel %vm1666, %v1621, 0.0
      %v1827 = vadd.f32 %v1825, %v1826
      %v1828 = vsel %vm1666, %v1622, 0.0
      %v1829 = vadd.f32 %v1827, %v1828
      %v1830 = vsel %vm1666, %v1623, 0.0
      %v1831 = vadd.f32 %v1829, %v1830
      %v1832 = vsel %vm1666, %v1624, 0.0
      %v1833 = vadd.f32 %v1831, %v1832
      %v1834 = vsel %vm1666, %v1625, 0.0
      %v1835 = vadd.f32 %v1833, %v1834
      %v1836 = vsel %vm1666, %v1626, 0.0
      %v1837 = vadd.f32 %v1835, %v1836
      %v1838 = vsel %vm1666, %v1627, 0.0
      %v1839 = vadd.f32 %v1837, %v1838
      %v1840 = vsel %vm1666, %v1628, 0.0
      %v1841 = vadd.f32 %v1839, %v1840
      %v1842 = vsel %vm1666, %v1629, 0.0
      %v1843 = vadd.f32 %v1841, %v1842
      %v1844 = vsel %vm1666, %v1630, 0.0
      %v1845 = vadd.f32 %v1843, %v1844
      %v1846 = vsel %vm1666, %v1631, 0.0
      %v1847 = vadd.f32 %v1845, %v1846
      %v1848 = vsel %vm1666, %v1632, 0.0
      %v1849 = vadd.f32 %v1847, %v1848
      %v1850 = vsel %vm1666, %v1633, 0.0
      %v1851 = vadd.f32 %v1849, %v1850
      %v1852 = vsel %vm1666, %v1634, 0.0
      %v1853 = vadd.f32 %v1851, %v1852
      %v1854 = vsel %vm1666, %v1635, 0.0
      %v1855 = vadd.f32 %v1853, %v1854
      %v1856 = vsel %vm1666, %v1636, 0.0
      %v1857 = vadd.f32 %v1855, %v1856
      %v1858 = vsel %vm1666, %v1637, 0.0
      %v1859 = vadd.f32 %v1857, %v1858
      %v1860 = vsel %vm1666, %v1638, 0.0
      %v1861 = vadd.f32 %v1859, %v1860
      %v1862 = vsel %vm1666, %v1639, 0.0
      %v1863 = vadd.f32 %v1861, %v1862
      %v1864 = vsel %vm1666, %v1640, 0.0
      %v1865 = vadd.f32 %v1863, %v1864
      %v1866 = vsel %vm1666, %v1641, 0.0
      %v1867 = vadd.f32 %v1865, %v1866
      %v1868 = vsel %vm1666, %v1642, 0.0
      %v1869 = vadd.f32 %v1867, %v1868
      %v1870 = vsel %vm1666, %v1643, 0.0
      %v1871 = vadd.f32 %v1869, %v1870
      %v1872 = vsel %vm1666, %v1644, 0.0
      %v1873 = vadd.f32 %v1871, %v1872
      %v1874 = vsel %vm1666, %v1645, 0.0
      %v1875 = vadd.f32 %v1873, %v1874
      %v1876 = vsel %vm1666, %v1646, 0.0
      %v1877 = vadd.f32 %v1875, %v1876
      %v1878 = vsel %vm1666, %v1647, 0.0
      %v1879 = vadd.f32 %v1877, %v1878
      %v1880 = vsel %vm1666, %v1648, 0.0
      %v1881 = vadd.f32 %v1879, %v1880
      %v1882 = vsel %vm1666, %v1649, 0.0
      %v1883 = vadd.f32 %v1881, %v1882
      %v1884 = vsel %vm1666, %v1650, 0.0
      %v1885 = vadd.f32 %v1883, %v1884
      %v1886 = vsel %vm1666, %v1651, 0.0
      %v1887 = vadd.f32 %v1885, %v1886
      %v1888 = vsel %vm1666, %v1652, 0.0
      %v1889 = vadd.f32 %v1887, %v1888
      %v1890 = vsel %vm1666, %v1653, 0.0
      %v1891 = vadd.f32 %v1889, %v1890
      %v1892 = vsel %vm1666, %v1654, 0.0
      %v1893 = vadd.f32 %v1891, %v1892
      %v1894 = vsel %vm1666, %v1655, 0.0
      %v1895 = vadd.f32 %v1893, %v1894
      %v1896 = vsel %vm1666, %v1656, 0.0
      %v1897 = vadd.f32 %v1895, %v1896
      %v1898 = vsel %vm1666, %v1657, 0.0
      %v1899 = vadd.f32 %v1897, %v1898
      %v1900 = vsel %vm1666, %v1658, 0.0
      %v1901 = vadd.f32 %v1899, %v1900
      %v1902 = vsel %vm1666, %v1659, 0.0
      %v1903 = vadd.f32 %v1901, %v1902
      %v1904 = vsel %vm1666, %v1660, 0.0
      %v1905 = vadd.f32 %v1903, %v1904
      %v1906 = vsel %vm1666, %v1661, 0.0
      %v1907 = vadd.f32 %v1905, %v1906
      %v1908 = vsel %vm1666, %v1662, 0.0
      %v1909 = vadd.f32 %v1907, %v1908
      %v1910 = vsel %vm1666, %v1663, 0.0
      %v1911 = vadd.f32 %v1909, %v1910
      %v1912 = vsel %vm1666, %v1664, 0.0
      %v1913 = vadd.f32 %v1911, %v1912
      %v1914 = vsel %vm1666, %v1665, 0.0
      %v1915 = vadd.f32 %v1913, %v1914
      %1916 = vadd.xlane.f32.xlu0 %v1915
      %v1917 = vpop.xlane.xlu0 %1916
      %v1918 = vrot.slane %v1917, 4
      %v1919 = vadd.f32 %v1917, %v1918
      %v1920 = vrot.slane %v1919, 2
      %v1921 = vadd.f32 %v1919, %v1920
      %v1922 = vrot.slane %v1921, 1
      %v1923 = vadd.f32 %v1921, %v1922
      %s1924 = vtos %v1923
      %v1925 = vstv %s1924
      %v1926 = vadd.f32 %v1415, %v1925
      %1927 = vst [vmem:[#allocation2] sm:$0xff] %v1926
    $region17: #{tpu_custom_call.1} parent=1 // pred_fallthru
      _
    // Predicated region
    $region18: #{tpu_custom_call.1} parent=1 // pred_check
      _
    $region19: #{tpu_custom_call.1} parent=1 // pred_check_branch
      %1929 = sbr.rel (0) target = $region21
    $region20: #{tpu_custom_call.1} parent=1 // pred_region
      %s1931 = ssub.s32 128, 128
      %1932 = vsyncadd [#allocation3], %s1931
      %s1934 = sshll.u32 [#allocation2], 4
      %s1935 = int_to_ptr.vmem [resolvable:$true] %s1934
      %1937 = dma.vmem_to_hbm [thread:$0]  %s1935, 128, %s1, [#allocation3]
    $region21: #{tpu_custom_call.1} parent=1 // pred_fallthru
      _
    // Predicated region
    $region22: #{tpu_custom_call.1} parent=1 // pred_check
      _
    $region23: #{tpu_custom_call.1} parent=1 // pred_check_branch
      %1939 = sbr.rel (0) target = $region25
    $region24: #{tpu_custom_call.1} parent=1 // pred_region
      %1940 = dma.done [#allocation3], 128
    $region25: #{tpu_custom_call.1} parent=1 // pred_fallthru
      _
    %1941 = vsyncpa [#allocation3], 1

</llo_original>
